<compile_context>
chip_gen: v7x
topology: tpu7x:2x2x1
jax: 0.10.0
libtpu: 0.0.40
codegen_flags: <defaults>
</compile_context>

<pallas_src>
import functools

import jax
import jax.numpy as jnp
from jax.experimental import pallas as pl
from jax.experimental.pallas import tpu as pltpu

LANE = 128
BATCH_ALIGN = 16          # sublane-pair alignment (safe for bf16 packing)
TB_MAX = 512              # max batch-tile rows (bf16 x/recon keep the VMEM footprint small)


def _round_up(n, m):
    return (n + m - 1) // m * m


def _cdiv(a, b):
    return -(-a // b)


def _vae_kernel(
    x_ref, eps_ref,
    w1_ref, b1_ref, w2_ref, b2_ref,
    w3_ref, b3_ref,                    # fused fc31|fc32 head, padded to 128 lanes
    w4_ref, b4_ref, w5_ref, b5_ref, w6_ref, b6_ref,
    recon_ref, mulv_ref,
    *, z_dim,
):
    f32 = jnp.float32
    bf16 = jnp.bfloat16

    def linear(h, w_ref, b_ref):
        # bf16 MXU inputs, f32 accumulation, f32 bias add (elementwise stays f32: v5e-safe).
        return jnp.dot(h.astype(bf16), w_ref[...],
                       preferred_element_type=f32) + b_ref[...]

    x = x_ref[...]                                      # (TB, 784) bf16 (already MXU dtype)

    # ---- encoder ----
    h = jnp.maximum(linear(x, w1_ref, b1_ref), 0.0)     # relu(fc1)
    h = jnp.maximum(linear(h, w2_ref, b2_ref), 0.0)     # relu(fc2)
    mulv = linear(h, w3_ref, b3_ref)                    # (TB, 128): [mu | log_var | zeros]
    mu = mulv[:, :z_dim]
    log_var = mulv[:, z_dim:2 * z_dim]

    # ---- sampling (reparameterization), f32 ----
    std = jnp.exp(0.5 * log_var)
    eps = eps_ref[...]                                  # (TB, 128), only first z_dim lanes used
    z = eps[:, :z_dim] * std + mu

    # ---- decoder ----
    d = jnp.maximum(linear(z, w4_ref, b4_ref), 0.0)     # relu(fc4)
    d = jnp.maximum(linear(d, w5_ref, b5_ref), 0.0)     # relu(fc5)
    recon = jax.nn.sigmoid(linear(d, w6_ref, b6_ref))   # sigmoid(fc6), lane-dense 896, f32

    recon_ref[...] = recon.astype(recon_ref.dtype)      # bf16 store (lane-dense, unmasked)
    mulv_ref[...] = mulv                                # f32, lane-dense 128


def vae_forward(x_img, eps, kernel_params):
    """x_img: (B, 1, 28, 28) f32 NCHW. eps: (B, z_dim). Returns (recon, mu, log_var)."""
    B = x_img.shape[0]
    x_flat = x_img.reshape(B, -1)                        # torch: x.view(-1, 784)
    x_dim = x_flat.shape[1]
    z_dim = eps.shape[1]

    (w1, b1, w2, b2, w3c, b3c, w4, b4, w5, b5, w6, b6) = kernel_params
    assert w1.shape[0] == x_dim                          # fc1 K kept at 784 (no host pad)
    x_pad_out = w6.shape[1]                              # 896 (padded N of fc6 / recon)
    head = w3c.shape[1]                                  # 128 (padded mu|log_var head)

    # ---- batch tiling ----
    B_pad0 = _round_up(max(B, BATCH_ALIGN), BATCH_ALIGN)
    if B_pad0 <= 2 * LANE:
        # Small batch: a single grid step; don't split a small tile (per-step overhead).
        TB = B_pad0
    elif B_pad0 <= 2 * TB_MAX:
        # Medium batch: exactly two steps so the "parallel" axis uses both v7x TCs.
        TB = _round_up(_cdiv(B_pad0, 2), BATCH_ALIGN)
    else:
        # Large batch: big tiles amortize the ~0.35us/step overhead.
        n_steps = _cdiv(B_pad0, TB_MAX)
        TB = _round_up(_cdiv(B_pad0, n_steps), BATCH_ALIGN)
    B_pad = _round_up(B_pad0, TB)
    grid = (B_pad // TB,)

    # x in bf16 at the boundary (cast fused into the pad); eps padded to a 128-lane tile.
    x_p = jnp.zeros((B_pad, x_dim), jnp.bfloat16).at[:B].set(x_flat.astype(jnp.bfloat16))
    eps_p = jnp.zeros((B_pad, head), jnp.float32).at[:B, :z_dim].set(eps.astype(jnp.float32))

    def batch_spec(n_cols):
        return pl.BlockSpec((TB, n_cols), lambda i: (i, 0))

    def resident(arr):
        # Same block for every grid step -> weights stay VMEM-resident (DMA'd once).
        return pl.BlockSpec(arr.shape, lambda i: (0, 0))

    weights = (w1, b1, w2, b2, w3c, b3c, w4, b4, w5, b5, w6, b6)
    in_specs = [batch_spec(x_dim), batch_spec(head)] + [resident(w) for w in weights]

    out_shapes = (
        jax.ShapeDtypeStruct((B_pad, x_pad_out), jnp.bfloat16),   # recon (padded, bf16)
        jax.ShapeDtypeStruct((B_pad, head), jnp.float32),         # [mu | log_var | zeros]
    )

    # Keep the footprint explicit so the config is portable to v7x's 32 MiB scoped VMEM.
    vmem_limit = (16 << 20) if TB > 128 else (8 << 20)

    recon_p, mulv_p = pl.pallas_call(
        functools.partial(_vae_kernel, z_dim=z_dim),
        out_shape=out_shapes,
        grid=grid,
        in_specs=in_specs,
        out_specs=(batch_spec(x_pad_out), batch_spec(head)),
        compiler_params=pltpu.CompilerParams(
            dimension_semantics=("parallel",),   # shards batch across TCs on v7x
            vmem_limit_bytes=vmem_limit,
        ),
    )(x_p, eps_p, *weights)

    recon = recon_p[:B, :x_dim].astype(jnp.float32)
    mu = mulv_p[:B, :z_dim]
    log_var = mulv_p[:B, z_dim:2 * z_dim]
    return recon, mu, log_var


def _init_linear(key, in_f, out_f):
    """torch.nn.Linear-style U(-1/sqrt(in), 1/sqrt(in)) init.

    Weight returned already transposed to (in_f, out_f); bias is (1, out_f).
    """
    kw, kb = jax.random.split(key)
    bound = 1.0 / jnp.sqrt(jnp.float32(in_f))
    w = jax.random.uniform(kw, (in_f, out_f), jnp.float32, -bound, bound)
    b = jax.random.uniform(kb, (1, out_f), jnp.float32, -bound, bound)
    return w, b


def make_vae_params(key, x_dim, h_dim1, h_dim2, z_dim):
    """Reference (f32, unfused, unpadded) parameters."""
    keys = jax.random.split(key, 7)
    w1, b1 = _init_linear(keys[0], x_dim, h_dim1)     # fc1
    w2, b2 = _init_linear(keys[1], h_dim1, h_dim2)    # fc2
    w31, b31 = _init_linear(keys[2], h_dim2, z_dim)   # fc31
    w32, b32 = _init_linear(keys[3], h_dim2, z_dim)   # fc32
    w4, b4 = _init_linear(keys[4], z_dim, h_dim2)     # fc4
    w5, b5 = _init_linear(keys[5], h_dim2, h_dim1)    # fc5
    w6, b6 = _init_linear(keys[6], h_dim1, x_dim)     # fc6
    return (w1, b1, w2, b2, w31, b31, w32, b32, w4, b4, w5, b5, w6, b6)


def pack_kernel_params(params, x_dim):
    """Fuse fc31|fc32 into a 128-lane head, pad fc6's N (784->896), cast weights to bf16."""
    (w1, b1, w2, b2, w31, b31, w32, b32, w4, b4, w5, b5, w6, b6) = params
    bf16 = jnp.bfloat16
    z_dim = w31.shape[1]
    x_pad_out = _round_up(x_dim, LANE)                  # 784 -> 896 (fc6 N / recon)
    head = LANE                                         # mu|log_var head padded to 128 lanes

    w3c = (jnp.zeros((w31.shape[0], head), jnp.float32)
           .at[:, :z_dim].set(w31)
           .at[:, z_dim:2 * z_dim].set(w32)).astype(bf16)
    b3c = (jnp.zeros((1, head), jnp.float32)
           .at[:, :z_dim].set(b31)
           .at[:, z_dim:2 * z_dim].set(b32))

    w6p = jnp.zeros((w6.shape[0], x_pad_out), jnp.float32).at[:, :x_dim].set(w6).astype(bf16)
    b6p = jnp.zeros((1, x_pad_out), jnp.float32).at[:, :x_dim].set(b6)

    return (w1.astype(bf16), b1, w2.astype(bf16), b2, w3c, b3c,
            w4.astype(bf16), b4, w5.astype(bf16), b5, w6p, b6p)


def vae_forward_ref(x_img, eps, params):
    """Pure-JAX f32 reference for correctness checking."""
    (w1, b1, w2, b2, w31, b31, w32, b32, w4, b4, w5, b5, w6, b6) = params
    x = x_img.reshape(x_img.shape[0], -1)
    h = jax.nn.relu(x @ w1 + b1)
    h = jax.nn.relu(h @ w2 + b2)
    mu = h @ w31 + b31
    log_var = h @ w32 + b32
    std = jnp.exp(0.5 * log_var)
    z = eps * std + mu
    d = jax.nn.relu(z @ w4 + b4)
    d = jax.nn.relu(d @ w5 + b5)
    recon = jax.nn.sigmoid(d @ w6 + b6)
    return recon, mu, log_var


if __name__ == "__main__":
    # Small shapes consistent with the module: x.view(-1, 784) fixes x_dim=784.
    B, x_dim, h_dim1, h_dim2, z_dim = 2, 784, 64, 32, 2

    root = jax.random.PRNGKey(0)
    k_x, k_eps, k_params = jax.random.split(root, 3)

    x_img = jax.random.uniform(k_x, (B, 1, 28, 28), jnp.float32)  # NCHW, like MNIST
    eps = jax.random.normal(k_eps, (B, z_dim), jnp.float32)       # torch.randn_like(std)

    params = make_vae_params(k_params, x_dim, h_dim1, h_dim2, z_dim)
    kparams = pack_kernel_params(params, x_dim)

    recon, mu, log_var = jax.block_until_ready(vae_forward(x_img, eps, kparams))

    # sanity check against the pure-JAX f32 reference (bf16 weights/x/recon -> loose tol)
    r_ref, mu_ref, lv_ref = vae_forward_ref(x_img, eps, params)
    assert recon.shape == (B, x_dim) and mu.shape == (B, z_dim) and log_var.shape == (B, z_dim)
    assert jnp.allclose(recon, r_ref, atol=1e-2)
    assert jnp.allclose(mu, mu_ref, atol=1e-2)
    assert jnp.allclose(log_var, lv_ref, atol=1e-2)

    print("KERNEL_OK")
</pallas_src>

<mosaic_0001>
module attributes {stable_mosaic.version = 11 : i64} {
  func.func @_vae_kernel(%arg0: i32, %arg1: memref<16x784xbf16, #tpu.memory_space<vmem>>, %arg2: memref<16x128xf32, #tpu.memory_space<vmem>>, %arg3: memref<784x64xbf16, #tpu.memory_space<vmem>>, %arg4: memref<1x64xf32, #tpu.memory_space<vmem>>, %arg5: memref<64x32xbf16, #tpu.memory_space<vmem>>, %arg6: memref<1x32xf32, #tpu.memory_space<vmem>>, %arg7: memref<32x128xbf16, #tpu.memory_space<vmem>>, %arg8: memref<1x128xf32, #tpu.memory_space<vmem>>, %arg9: memref<2x32xbf16, #tpu.memory_space<vmem>>, %arg10: memref<1x32xf32, #tpu.memory_space<vmem>>, %arg11: memref<32x64xbf16, #tpu.memory_space<vmem>>, %arg12: memref<1x64xf32, #tpu.memory_space<vmem>>, %arg13: memref<64x896xbf16, #tpu.memory_space<vmem>>, %arg14: memref<1x896xf32, #tpu.memory_space<vmem>>, %arg15: memref<16x896xbf16, #tpu.memory_space<vmem>>, %arg16: memref<16x128xf32, #tpu.memory_space<vmem>>) attributes {dimension_semantics = [#tpu.dimension_semantics<parallel>], iteration_bounds = array<i64: 1>, scalar_prefetch = 0 : i64, scratch_operands = 0 : i64, tpu.core_type = #tpu.core_type<tc>, window_params = [{transform_indices = @transform_0, window_bounds = array<i64: 16, 784>}, {transform_indices = @transform_1, window_bounds = array<i64: 16, 128>}, {pipeline_mode = #tpu.pipeline_mode<synchronous>, transform_indices = @transform_2, window_bounds = array<i64: 784, 64>}, {pipeline_mode = #tpu.pipeline_mode<synchronous>, transform_indices = @transform_3, window_bounds = array<i64: 1, 64>}, {pipeline_mode = #tpu.pipeline_mode<synchronous>, transform_indices = @transform_4, window_bounds = array<i64: 64, 32>}, {pipeline_mode = #tpu.pipeline_mode<synchronous>, transform_indices = @transform_5, window_bounds = array<i64: 1, 32>}, {pipeline_mode = #tpu.pipeline_mode<synchronous>, transform_indices = @transform_6, window_bounds = array<i64: 32, 128>}, {pipeline_mode = #tpu.pipeline_mode<synchronous>, transform_indices = @transform_7, window_bounds = array<i64: 1, 128>}, {pipeline_mode = #tpu.pipeline_mode<synchronous>, transform_indices = @transform_8, window_bounds = array<i64: 2, 32>}, {pipeline_mode = #tpu.pipeline_mode<synchronous>, transform_indices = @transform_9, window_bounds = array<i64: 1, 32>}, {pipeline_mode = #tpu.pipeline_mode<synchronous>, transform_indices = @transform_10, window_bounds = array<i64: 32, 64>}, {pipeline_mode = #tpu.pipeline_mode<synchronous>, transform_indices = @transform_11, window_bounds = array<i64: 1, 64>}, {pipeline_mode = #tpu.pipeline_mode<synchronous>, transform_indices = @transform_12, window_bounds = array<i64: 64, 896>}, {pipeline_mode = #tpu.pipeline_mode<synchronous>, transform_indices = @transform_13, window_bounds = array<i64: 1, 896>}, {transform_indices = @transform_14, window_bounds = array<i64: 16, 896>}, {transform_indices = @transform_15, window_bounds = array<i64: 16, 128>}]} {
    %c0 = arith.constant 0 : index
    %c0_0 = arith.constant 0 : index
    %0 = vector.load %arg1[%c0, %c0_0] : memref<16x784xbf16, #tpu.memory_space<vmem>>, vector<16x784xbf16>
    %c0_1 = arith.constant 0 : index
    %c0_2 = arith.constant 0 : index
    %1 = vector.load %arg3[%c0_1, %c0_2] : memref<784x64xbf16, #tpu.memory_space<vmem>>, vector<784x64xbf16>
    %cst = arith.constant dense<0.000000e+00> : vector<16x64xf32>
    %2 = tpu.matmul %0, %1, %cst {dimension_numbers = #tpu.dot_dimension_numbers<[1], [0], [0], [1], [0, 0, 1, 1], [], []>} : vector<16x784xbf16>, vector<784x64xbf16>, vector<16x64xf32> -> vector<16x64xf32>
    %c0_3 = arith.constant 0 : index
    %c0_4 = arith.constant 0 : index
    %3 = vector.load %arg4[%c0_3, %c0_4] : memref<1x64xf32, #tpu.memory_space<vmem>>, vector<1x64xf32>
    %4 = vector.broadcast %3 : vector<1x64xf32> to vector<16x64xf32>
    %5 = arith.addf %2, %4 : vector<16x64xf32>
    %cst_5 = arith.constant 0.000000e+00 : f32
    %6 = vector.broadcast %cst_5 : f32 to vector<16x64xf32>
    %7 = arith.maximumf %5, %6 : vector<16x64xf32>
    %8 = arith.truncf %7 : vector<16x64xf32> to vector<16x64xbf16>
    %c0_6 = arith.constant 0 : index
    %c0_7 = arith.constant 0 : index
    %9 = vector.load %arg5[%c0_6, %c0_7] : memref<64x32xbf16, #tpu.memory_space<vmem>>, vector<64x32xbf16>
    %cst_8 = arith.constant dense<0.000000e+00> : vector<16x32xf32>
    %10 = tpu.matmul %8, %9, %cst_8 {dimension_numbers = #tpu.dot_dimension_numbers<[1], [0], [0], [1], [0, 0, 1, 1], [], []>} : vector<16x64xbf16>, vector<64x32xbf16>, vector<16x32xf32> -> vector<16x32xf32>
    %c0_9 = arith.constant 0 : index
    %c0_10 = arith.constant 0 : index
    %11 = vector.load %arg6[%c0_9, %c0_10] : memref<1x32xf32, #tpu.memory_space<vmem>>, vector<1x32xf32>
    %12 = vector.broadcast %11 : vector<1x32xf32> to vector<16x32xf32>
    %13 = arith.addf %10, %12 : vector<16x32xf32>
    %cst_11 = arith.constant 0.000000e+00 : f32
    %14 = vector.broadcast %cst_11 : f32 to vector<16x32xf32>
    %15 = arith.maximumf %13, %14 : vector<16x32xf32>
    %16 = arith.truncf %15 : vector<16x32xf32> to vector<16x32xbf16>
    %c0_12 = arith.constant 0 : index
    %c0_13 = arith.constant 0 : index
    %17 = vector.load %arg7[%c0_12, %c0_13] : memref<32x128xbf16, #tpu.memory_space<vmem>>, vector<32x128xbf16>
    %cst_14 = arith.constant dense<0.000000e+00> : vector<16x128xf32>
    %18 = tpu.matmul %16, %17, %cst_14 {dimension_numbers = #tpu.dot_dimension_numbers<[1], [0], [0], [1], [0, 0, 1, 1], [], []>} : vector<16x32xbf16>, vector<32x128xbf16>, vector<16x128xf32> -> vector<16x128xf32>
    %c0_15 = arith.constant 0 : index
    %c0_16 = arith.constant 0 : index
    %19 = vector.load %arg8[%c0_15, %c0_16] : memref<1x128xf32, #tpu.memory_space<vmem>>, vector<1x128xf32>
    %20 = vector.broadcast %19 : vector<1x128xf32> to vector<16x128xf32>
    %21 = arith.addf %18, %20 : vector<16x128xf32>
    %22 = vector.extract_strided_slice %21 {offsets = [0, 0], sizes = [16, 2], strides = [1, 1]} : vector<16x128xf32> to vector<16x2xf32>
    %23 = vector.extract_strided_slice %21 {offsets = [0, 2], sizes = [16, 2], strides = [1, 1]} : vector<16x128xf32> to vector<16x2xf32>
    %cst_17 = arith.constant 5.000000e-01 : f32
    %24 = vector.broadcast %cst_17 : f32 to vector<16x2xf32>
    %25 = arith.mulf %24, %23 : vector<16x2xf32>
    %26 = math.exp %25 : vector<16x2xf32>
    %c0_18 = arith.constant 0 : index
    %c0_19 = arith.constant 0 : index
    %27 = vector.load %arg2[%c0_18, %c0_19] : memref<16x128xf32, #tpu.memory_space<vmem>>, vector<16x128xf32>
    %28 = vector.extract_strided_slice %27 {offsets = [0, 0], sizes = [16, 2], strides = [1, 1]} : vector<16x128xf32> to vector<16x2xf32>
    %29 = arith.mulf %28, %26 : vector<16x2xf32>
    %30 = arith.addf %29, %22 : vector<16x2xf32>
    %31 = arith.truncf %30 : vector<16x2xf32> to vector<16x2xbf16>
    %c0_20 = arith.constant 0 : index
    %c0_21 = arith.constant 0 : index
    %32 = vector.load %arg9[%c0_20, %c0_21] : memref<2x32xbf16, #tpu.memory_space<vmem>>, vector<2x32xbf16>
    %cst_22 = arith.constant dense<0.000000e+00> : vector<16x32xf32>
    %33 = tpu.matmul %31, %32, %cst_22 {dimension_numbers = #tpu.dot_dimension_numbers<[1], [0], [0], [1], [0, 0, 1, 1], [], []>} : vector<16x2xbf16>, vector<2x32xbf16>, vector<16x32xf32> -> vector<16x32xf32>
    %c0_23 = arith.constant 0 : index
    %c0_24 = arith.constant 0 : index
    %34 = vector.load %arg10[%c0_23, %c0_24] : memref<1x32xf32, #tpu.memory_space<vmem>>, vector<1x32xf32>
    %35 = vector.broadcast %34 : vector<1x32xf32> to vector<16x32xf32>
    %36 = arith.addf %33, %35 : vector<16x32xf32>
    %cst_25 = arith.constant 0.000000e+00 : f32
    %37 = vector.broadcast %cst_25 : f32 to vector<16x32xf32>
    %38 = arith.maximumf %36, %37 : vector<16x32xf32>
    %39 = arith.truncf %38 : vector<16x32xf32> to vector<16x32xbf16>
    %c0_26 = arith.constant 0 : index
    %c0_27 = arith.constant 0 : index
    %40 = vector.load %arg11[%c0_26, %c0_27] : memref<32x64xbf16, #tpu.memory_space<vmem>>, vector<32x64xbf16>
    %cst_28 = arith.constant dense<0.000000e+00> : vector<16x64xf32>
    %41 = tpu.matmul %39, %40, %cst_28 {dimension_numbers = #tpu.dot_dimension_numbers<[1], [0], [0], [1], [0, 0, 1, 1], [], []>} : vector<16x32xbf16>, vector<32x64xbf16>, vector<16x64xf32> -> vector<16x64xf32>
    %c0_29 = arith.constant 0 : index
    %c0_30 = arith.constant 0 : index
    %42 = vector.load %arg12[%c0_29, %c0_30] : memref<1x64xf32, #tpu.memory_space<vmem>>, vector<1x64xf32>
    %43 = vector.broadcast %42 : vector<1x64xf32> to vector<16x64xf32>
    %44 = arith.addf %41, %43 : vector<16x64xf32>
    %cst_31 = arith.constant 0.000000e+00 : f32
    %45 = vector.broadcast %cst_31 : f32 to vector<16x64xf32>
    %46 = arith.maximumf %44, %45 : vector<16x64xf32>
    %47 = arith.truncf %46 : vector<16x64xf32> to vector<16x64xbf16>
    %c0_32 = arith.constant 0 : index
    %c0_33 = arith.constant 0 : index
    %48 = vector.load %arg13[%c0_32, %c0_33] : memref<64x896xbf16, #tpu.memory_space<vmem>>, vector<64x896xbf16>
    %cst_34 = arith.constant dense<0.000000e+00> : vector<16x896xf32>
    %49 = tpu.matmul %47, %48, %cst_34 {dimension_numbers = #tpu.dot_dimension_numbers<[1], [0], [0], [1], [0, 0, 1, 1], [], []>} : vector<16x64xbf16>, vector<64x896xbf16>, vector<16x896xf32> -> vector<16x896xf32>
    %c0_35 = arith.constant 0 : index
    %c0_36 = arith.constant 0 : index
    %50 = vector.load %arg14[%c0_35, %c0_36] : memref<1x896xf32, #tpu.memory_space<vmem>>, vector<1x896xf32>
    %51 = vector.broadcast %50 : vector<1x896xf32> to vector<16x896xf32>
    %52 = arith.addf %49, %51 : vector<16x896xf32>
    %53 = arith.negf %52 : vector<16x896xf32>
    %54 = math.exp %53 : vector<16x896xf32>
    %cst_37 = arith.constant 1.000000e+00 : f32
    %55 = vector.broadcast %cst_37 : f32 to vector<16x896xf32>
    %56 = arith.addf %55, %54 : vector<16x896xf32>
    %57 = arith.divf %55, %56 : vector<16x896xf32>
    %58 = arith.truncf %57 : vector<16x896xf32> to vector<16x896xbf16>
    %c0_38 = arith.constant 0 : index
    %c0_39 = arith.constant 0 : index
    %59 = vector.load %arg15[%c0_38, %c0_39] : memref<16x896xbf16, #tpu.memory_space<vmem>>, vector<16x896xbf16>
    tpu.vector_store %arg15[%c0_38, %c0_39], %58 {strides = array<i32>} : memref<16x896xbf16, #tpu.memory_space<vmem>>, vector<16x896xbf16>,
    %c0_40 = arith.constant 0 : index
    %c0_41 = arith.constant 0 : index
    %60 = vector.load %arg16[%c0_40, %c0_41] : memref<16x128xf32, #tpu.memory_space<vmem>>, vector<16x128xf32>
    tpu.vector_store %arg16[%c0_40, %c0_41], %21 {strides = array<i32>} : memref<16x128xf32, #tpu.memory_space<vmem>>, vector<16x128xf32>,
    return
  }
  func.func @transform_0(%arg0: i32) -> (i32, i32) {
    %c0_i32 = arith.constant 0 : i32
    %c0_i32_0 = arith.constant 0 : i32
    return %arg0, %c0_i32 : i32, i32
  }
  func.func @transform_1(%arg0: i32) -> (i32, i32) {
    %c0_i32 = arith.constant 0 : i32
    %c0_i32_0 = arith.constant 0 : i32
    return %arg0, %c0_i32 : i32, i32
  }
  func.func @transform_2(%arg0: i32) -> (i32, i32) {
    %c0_i32 = arith.constant 0 : i32
    %c0_i32_0 = arith.constant 0 : i32
    %c0_i32_1 = arith.constant 0 : i32
    return %c0_i32, %c0_i32_0 : i32, i32
  }
  func.func @transform_3(%arg0: i32) -> (i32, i32) {
    %c0_i32 = arith.constant 0 : i32
    %c0_i32_0 = arith.constant 0 : i32
    %c0_i32_1 = arith.constant 0 : i32
    return %c0_i32, %c0_i32_0 : i32, i32
  }
  func.func @transform_4(%arg0: i32) -> (i32, i32) {
    %c0_i32 = arith.constant 0 : i32
    %c0_i32_0 = arith.constant 0 : i32
    %c0_i32_1 = arith.constant 0 : i32
    return %c0_i32, %c0_i32_0 : i32, i32
  }
  func.func @transform_5(%arg0: i32) -> (i32, i32) {
    %c0_i32 = arith.constant 0 : i32
    %c0_i32_0 = arith.constant 0 : i32
    %c0_i32_1 = arith.constant 0 : i32
    return %c0_i32, %c0_i32_0 : i32, i32
  }
  func.func @transform_6(%arg0: i32) -> (i32, i32) {
    %c0_i32 = arith.constant 0 : i32
    %c0_i32_0 = arith.constant 0 : i32
    %c0_i32_1 = arith.constant 0 : i32
    return %c0_i32, %c0_i32_0 : i32, i32
  }
  func.func @transform_7(%arg0: i32) -> (i32, i32) {
    %c0_i32 = arith.constant 0 : i32
    %c0_i32_0 = arith.constant 0 : i32
    %c0_i32_1 = arith.constant 0 : i32
    return %c0_i32, %c0_i32_0 : i32, i32
  }
  func.func @transform_8(%arg0: i32) -> (i32, i32) {
    %c0_i32 = arith.constant 0 : i32
    %c0_i32_0 = arith.constant 0 : i32
    %c0_i32_1 = arith.constant 0 : i32
    return %c0_i32, %c0_i32_0 : i32, i32
  }
  func.func @transform_9(%arg0: i32) -> (i32, i32) {
    %c0_i32 = arith.constant 0 : i32
    %c0_i32_0 = arith.constant 0 : i32
    %c0_i32_1 = arith.constant 0 : i32
    return %c0_i32, %c0_i32_0 : i32, i32
  }
  func.func @transform_10(%arg0: i32) -> (i32, i32) {
    %c0_i32 = arith.constant 0 : i32
    %c0_i32_0 = arith.constant 0 : i32
    %c0_i32_1 = arith.constant 0 : i32
    return %c0_i32, %c0_i32_0 : i32, i32
  }
  func.func @transform_11(%arg0: i32) -> (i32, i32) {
    %c0_i32 = arith.constant 0 : i32
    %c0_i32_0 = arith.constant 0 : i32
    %c0_i32_1 = arith.constant 0 : i32
    return %c0_i32, %c0_i32_0 : i32, i32
  }
  func.func @transform_12(%arg0: i32) -> (i32, i32) {
    %c0_i32 = arith.constant 0 : i32
    %c0_i32_0 = arith.constant 0 : i32
    %c0_i32_1 = arith.constant 0 : i32
    return %c0_i32, %c0_i32_0 : i32, i32
  }
  func.func @transform_13(%arg0: i32) -> (i32, i32) {
    %c0_i32 = arith.constant 0 : i32
    %c0_i32_0 = arith.constant 0 : i32
    %c0_i32_1 = arith.constant 0 : i32
    return %c0_i32, %c0_i32_0 : i32, i32
  }
  func.func @transform_14(%arg0: i32) -> (i32, i32) {
    %c0_i32 = arith.constant 0 : i32
    %c0_i32_0 = arith.constant 0 : i32
    return %arg0, %c0_i32 : i32, i32
  }
  func.func @transform_15(%arg0: i32) -> (i32, i32) {
    %c0_i32 = arith.constant 0 : i32
    %c0_i32_0 = arith.constant 0 : i32
    return %arg0, %c0_i32 : i32, i32
  }
}

</mosaic_0001>

<llo_original>
// kernel: tpu_custom_call.1
$region0: #{tpu_custom_call.1}
  #allocation0 [shape = 'u32[]', space=smem, size = 0x4, offset = 0x4, fixed_abs, tag = 'smem constant byte address 0x4 - core index']
  #allocation1 [shape = 'u32[144,128]{1,0:T(1,128)}', space=vmem, size = 0x12000, scoped, tag = 'internal scratch']
  %s0 = inlined_call_operand.vmem [shape: bf16[16,784], index: 0, kind: input, shape index: {}]
  %s1 = inlined_call_operand.vmem [shape: f32[16,128], index: 1, kind: input, shape index: {}]
  %s2 = inlined_call_operand.vmem [shape: bf16[784,64], index: 2, kind: input, shape index: {}]
  %s3 = inlined_call_operand.vmem [shape: f32[1,64], index: 3, kind: input, shape index: {}]
  %s4 = inlined_call_operand.vmem [shape: bf16[64,32], index: 4, kind: input, shape index: {}]
  %s5 = inlined_call_operand.vmem [shape: f32[1,32], index: 5, kind: input, shape index: {}]
  %s6 = inlined_call_operand.vmem [shape: bf16[32,128], index: 6, kind: input, shape index: {}]
  %s7 = inlined_call_operand.vmem [shape: f32[1,128], index: 7, kind: input, shape index: {}]
  %s8 = inlined_call_operand.vmem [shape: bf16[2,32], index: 8, kind: input, shape index: {}]
  %s9 = inlined_call_operand.vmem [shape: f32[1,32], index: 9, kind: input, shape index: {}]
  %s10 = inlined_call_operand.vmem [shape: bf16[32,64], index: 10, kind: input, shape index: {}]
  %s11 = inlined_call_operand.vmem [shape: f32[1,64], index: 11, kind: input, shape index: {}]
  %s12 = inlined_call_operand.vmem [shape: bf16[64,896], index: 12, kind: input, shape index: {}]
  %s13 = inlined_call_operand.vmem [shape: f32[1,896], index: 13, kind: input, shape index: {}]
  %s14 = inlined_call_operand.hbm [shape: bf16[16,896], index: 14, kind: output, shape index: {0}]
  %s15 = inlined_call_operand.hbm [shape: f32[16,128], index: 15, kind: output, shape index: {1}]
  %16 = xla_tuple %s14, %s15
  %s17 = sld [smem:[#allocation0]]
  $region74: #{tpu_custom_call.1} parent=0
    _
  %s19 = ssub.s32 1, %s17
  %s20 = scalar_select 0, %s19, %s17
  $region1: #{tpu_custom_call.1} parent=0
    #allocation2 [shape = 'u8[28672]{0}', space=vmem, size = 0x7000, scoped, tag = 'output window, operand 0, single buffered']
    #allocation3 [shape = 's32[1]{0}', space=sflag, size = 0x4, scoped, tag = 'scoped memory for tpu_custom_call.1']
    #allocation4 [shape = 'u8[8192]{0}', space=vmem, size = 0x2000, scoped, tag = 'output window, operand 1, single buffered']
    #allocation5 [shape = 's32[1]{0}', space=sflag, size = 0x4, scoped, tag = 'scoped memory for tpu_custom_call.1']
    %21 = vsyncpa [#allocation3], 0
    %22 = vsyncpa [#allocation5], 0
    // Predicated region
    $region2: #{tpu_custom_call.1} parent=1 // pred_check
      _
    $region3: #{tpu_custom_call.1} parent=1 // pred_check_branch
      %24 = sbr.rel (0) target = $region5
    $region4: #{tpu_custom_call.1} parent=1 // pred_region
      _
    $region5: #{tpu_custom_call.1} parent=1 // pred_fallthru
      _
    // Predicated region
    $region6: #{tpu_custom_call.1} parent=1 // pred_check
      _
    $region7: #{tpu_custom_call.1} parent=1 // pred_check_branch
      %26 = sbr.rel (0) target = $region9
    $region8: #{tpu_custom_call.1} parent=1 // pred_region
      _
    $region9: #{tpu_custom_call.1} parent=1 // pred_fallthru
      _
    // Predicated region
    $region10: #{tpu_custom_call.1} parent=1 // pred_check
      _
    $region11: #{tpu_custom_call.1} parent=1 // pred_check_branch
      %28 = sbr.rel (0) target = $region13
    $region12: #{tpu_custom_call.1} parent=1 // pred_region
      _
    $region13: #{tpu_custom_call.1} parent=1 // pred_fallthru
      _
    // Predicated region
    $region14: #{tpu_custom_call.1} parent=1 // pred_check
      _
    $region15: #{tpu_custom_call.1} parent=1 // pred_check_branch
      %30 = sbr.rel (0) target = $region17
    $region16: #{tpu_custom_call.1} parent=1 // pred_region
      _
    $region17: #{tpu_custom_call.1} parent=1 // pred_fallthru
      _
    // Predicated region
    $region18: #{tpu_custom_call.1} parent=1 // pred_check
      _
    $region19: #{tpu_custom_call.1} parent=1 // pred_check_branch
      %32 = sbr.rel (0) target = $region21
    $region20: #{tpu_custom_call.1} parent=1 // pred_region
      _
    $region21: #{tpu_custom_call.1} parent=1 // pred_fallthru
      _
    // Predicated region
    $region22: #{tpu_custom_call.1} parent=1 // pred_check
      _
    $region23: #{tpu_custom_call.1} parent=1 // pred_check_branch
      %34 = sbr.rel (0) target = $region25
    $region24: #{tpu_custom_call.1} parent=1 // pred_region
      _
    $region25: #{tpu_custom_call.1} parent=1 // pred_fallthru
      _
    // Predicated region
    $region26: #{tpu_custom_call.1} parent=1 // pred_check
      _
    $region27: #{tpu_custom_call.1} parent=1 // pred_check_branch
      %36 = sbr.rel (0) target = $region29
    $region28: #{tpu_custom_call.1} parent=1 // pred_region
      _
    $region29: #{tpu_custom_call.1} parent=1 // pred_fallthru
      _
    // Predicated region
    $region30: #{tpu_custom_call.1} parent=1 // pred_check
      _
    $region31: #{tpu_custom_call.1} parent=1 // pred_check_branch
      %38 = sbr.rel (0) target = $region33
    $region32: #{tpu_custom_call.1} parent=1 // pred_region
      _
    $region33: #{tpu_custom_call.1} parent=1 // pred_fallthru
      _
    // Predicated region
    $region34: #{tpu_custom_call.1} parent=1 // pred_check
      _
    $region35: #{tpu_custom_call.1} parent=1 // pred_check_branch
      %40 = sbr.rel (0) target = $region37
    $region36: #{tpu_custom_call.1} parent=1 // pred_region
      _
    $region37: #{tpu_custom_call.1} parent=1 // pred_fallthru
      _
    // Predicated region
    $region38: #{tpu_custom_call.1} parent=1 // pred_check
      _
    $region39: #{tpu_custom_call.1} parent=1 // pred_check_branch
      %42 = sbr.rel (0) target = $region41
    $region40: #{tpu_custom_call.1} parent=1 // pred_region
      _
    $region41: #{tpu_custom_call.1} parent=1 // pred_fallthru
      _
    // Predicated region
    $region42: #{tpu_custom_call.1} parent=1 // pred_check
      _
    $region43: #{tpu_custom_call.1} parent=1 // pred_check_branch
      %44 = sbr.rel (0) target = $region45
    $region44: #{tpu_custom_call.1} parent=1 // pred_region
      _
    $region45: #{tpu_custom_call.1} parent=1 // pred_fallthru
      _
    // Predicated region
    $region46: #{tpu_custom_call.1} parent=1 // pred_check
      _
    $region47: #{tpu_custom_call.1} parent=1 // pred_check_branch
      %46 = sbr.rel (0) target = $region49
    $region48: #{tpu_custom_call.1} parent=1 // pred_region
      _
    $region49: #{tpu_custom_call.1} parent=1 // pred_fallthru
      _
    // Predicated region
    $region50: #{tpu_custom_call.1} parent=1 // pred_check
      _
    $region51: #{tpu_custom_call.1} parent=1 // pred_check_branch
      %48 = sbr.rel (0) target = $region53
    $region52: #{tpu_custom_call.1} parent=1 // pred_region
      _
    $region53: #{tpu_custom_call.1} parent=1 // pred_fallthru
      _
    // Predicated region
    $region54: #{tpu_custom_call.1} parent=1 // pred_check
      _
    $region55: #{tpu_custom_call.1} parent=1 // pred_check_branch
      %50 = sbr.rel (0) target = $region57
    $region56: #{tpu_custom_call.1} parent=1 // pred_region
      _
    $region57: #{tpu_custom_call.1} parent=1 // pred_fallthru
      _
    %v52 = vld [vmem:[%s0] sm:$0xff]
    %v53 = vld [vmem:[%s0 + $0x8] sm:$0xff]
    %v54 = vld [vmem:[%s0 + $0x10] sm:$0xff]
    %v55 = vld [vmem:[%s0 + $0x18] sm:$0xf]
    %v56 = vld [vmem:[%s0 + $0x1c] sm:$0xff]
    %v57 = vld [vmem:[%s0 + $0x24] sm:$0xff]
    %v58 = vld [vmem:[%s0 + $0x2c] sm:$0xff]
    %v59 = vld [vmem:[%s0 + $0x34] sm:$0xf]
    %v60 = vld [vmem:[%s2] sm:$0xf]
    %v61 = vld [vmem:[%s2 + $0x4] sm:$0xf]
    %v62 = vld [vmem:[%s2 + $0x8] sm:$0xf]
    %v63 = vld [vmem:[%s2 + $0xc] sm:$0xf]
    %v64 = vld [vmem:[%s2 + $0x10] sm:$0xf]
    %v65 = vld [vmem:[%s2 + $0x14] sm:$0xf]
    %v66 = vld [vmem:[%s2 + $0x18] sm:$0xf]
    %v67 = vld [vmem:[%s2 + $0x1c] sm:$0xf]
    %v68 = vld [vmem:[%s2 + $0x20] sm:$0xf]
    %v69 = vld [vmem:[%s2 + $0x24] sm:$0xf]
    %v70 = vld [vmem:[%s2 + $0x28] sm:$0xf]
    %v71 = vld [vmem:[%s2 + $0x2c] sm:$0xf]
    %v72 = vld [vmem:[%s2 + $0x30] sm:$0xf]
    %v73 = vld [vmem:[%s2 + $0x34] sm:$0xf]
    %v74 = vld [vmem:[%s2 + $0x38] sm:$0xf]
    %v75 = vld [vmem:[%s2 + $0x3c] sm:$0xf]
    %v76 = vld [vmem:[%s2 + $0x40] sm:$0xf]
    %v77 = vld [vmem:[%s2 + $0x44] sm:$0xf]
    %v78 = vld [vmem:[%s2 + $0x48] sm:$0xf]
    %v79 = vld [vmem:[%s2 + $0x4c] sm:$0xf]
    %v80 = vld [vmem:[%s2 + $0x50] sm:$0xf]
    %v81 = vld [vmem:[%s2 + $0x54] sm:$0xf]
    %v82 = vld [vmem:[%s2 + $0x58] sm:$0xf]
    %v83 = vld [vmem:[%s2 + $0x5c] sm:$0xf]
    %v84 = vld [vmem:[%s2 + $0x60] sm:$0xf]
    %v85 = vld [vmem:[%s2 + $0x64] sm:$0xf]
    %v86 = vld [vmem:[%s2 + $0x68] sm:$0xf]
    %v87 = vld [vmem:[%s2 + $0x6c] sm:$0xf]
    %v88 = vld [vmem:[%s2 + $0x70] sm:$0xf]
    %v89 = vld [vmem:[%s2 + $0x74] sm:$0xf]
    %v90 = vld [vmem:[%s2 + $0x78] sm:$0xf]
    %v91 = vld [vmem:[%s2 + $0x7c] sm:$0xf]
    %v92 = vld [vmem:[%s2 + $0x80] sm:$0xf]
    %v93 = vld [vmem:[%s2 + $0x84] sm:$0xf]
    %v94 = vld [vmem:[%s2 + $0x88] sm:$0xf]
    %v95 = vld [vmem:[%s2 + $0x8c] sm:$0xf]
    %v96 = vld [vmem:[%s2 + $0x90] sm:$0xf]
    %v97 = vld [vmem:[%s2 + $0x94] sm:$0xf]
    %v98 = vld [vmem:[%s2 + $0x98] sm:$0xf]
    %v99 = vld [vmem:[%s2 + $0x9c] sm:$0xf]
    %v100 = vld [vmem:[%s2 + $0xa0] sm:$0xf]
    %v101 = vld [vmem:[%s2 + $0xa4] sm:$0xf]
    %v102 = vld [vmem:[%s2 + $0xa8] sm:$0xf]
    %v103 = vld [vmem:[%s2 + $0xac] sm:$0xf]
    %v104 = vld [vmem:[%s2 + $0xb0] sm:$0xf]
    %v105 = vld [vmem:[%s2 + $0xb4] sm:$0xf]
    %v106 = vld [vmem:[%s2 + $0xb8] sm:$0xf]
    %v107 = vld [vmem:[%s2 + $0xbc] sm:$0xf]
    %v108 = vld [vmem:[%s2 + $0xc0] sm:$0xf]
    %v109 = vld [vmem:[%s2 + $0xc4] sm:$0xf]
    %v110 = vld [vmem:[%s2 + $0xc8] sm:$0xf]
    %v111 = vld [vmem:[%s2 + $0xcc] sm:$0xf]
    %v112 = vld [vmem:[%s2 + $0xd0] sm:$0xf]
    %v113 = vld [vmem:[%s2 + $0xd4] sm:$0xf]
    %v114 = vld [vmem:[%s2 + $0xd8] sm:$0xf]
    %v115 = vld [vmem:[%s2 + $0xdc] sm:$0xf]
    %v116 = vld [vmem:[%s2 + $0xe0] sm:$0xf]
    %v117 = vld [vmem:[%s2 + $0xe4] sm:$0xf]
    %v118 = vld [vmem:[%s2 + $0xe8] sm:$0xf]
    %v119 = vld [vmem:[%s2 + $0xec] sm:$0xf]
    %v120 = vld [vmem:[%s2 + $0xf0] sm:$0xf]
    %v121 = vld [vmem:[%s2 + $0xf4] sm:$0xf]
    %v122 = vld [vmem:[%s2 + $0xf8] sm:$0xf]
    %v123 = vld [vmem:[%s2 + $0xfc] sm:$0xf]
    %v124 = vld [vmem:[%s2 + $0x100] sm:$0xf]
    %v125 = vld [vmem:[%s2 + $0x104] sm:$0xf]
    %v126 = vld [vmem:[%s2 + $0x108] sm:$0xf]
    %v127 = vld [vmem:[%s2 + $0x10c] sm:$0xf]
    %v128 = vld [vmem:[%s2 + $0x110] sm:$0xf]
    %v129 = vld [vmem:[%s2 + $0x114] sm:$0xf]
    %v130 = vld [vmem:[%s2 + $0x118] sm:$0xf]
    %v131 = vld [vmem:[%s2 + $0x11c] sm:$0xf]
    %v132 = vld [vmem:[%s2 + $0x120] sm:$0xf]
    %v133 = vld [vmem:[%s2 + $0x124] sm:$0xf]
    %v134 = vld [vmem:[%s2 + $0x128] sm:$0xf]
    %v135 = vld [vmem:[%s2 + $0x12c] sm:$0xf]
    %v136 = vld [vmem:[%s2 + $0x130] sm:$0xf]
    %v137 = vld [vmem:[%s2 + $0x134] sm:$0xf]
    %v138 = vld [vmem:[%s2 + $0x138] sm:$0xf]
    %v139 = vld [vmem:[%s2 + $0x13c] sm:$0xf]
    %v140 = vld [vmem:[%s2 + $0x140] sm:$0xf]
    %v141 = vld [vmem:[%s2 + $0x144] sm:$0xf]
    %v142 = vld [vmem:[%s2 + $0x148] sm:$0xf]
    %v143 = vld [vmem:[%s2 + $0x14c] sm:$0xf]
    %v144 = vld [vmem:[%s2 + $0x150] sm:$0xf]
    %v145 = vld [vmem:[%s2 + $0x154] sm:$0xf]
    %v146 = vld [vmem:[%s2 + $0x158] sm:$0xf]
    %v147 = vld [vmem:[%s2 + $0x15c] sm:$0xf]
    %v148 = vld [vmem:[%s2 + $0x160] sm:$0xf]
    %v149 = vld [vmem:[%s2 + $0x164] sm:$0xf]
    %v150 = vld [vmem:[%s2 + $0x168] sm:$0xf]
    %v151 = vld [vmem:[%s2 + $0x16c] sm:$0xf]
    %v152 = vld [vmem:[%s2 + $0x170] sm:$0xf]
    %v153 = vld [vmem:[%s2 + $0x174] sm:$0xf]
    %v154 = vld [vmem:[%s2 + $0x178] sm:$0xf]
    %v155 = vld [vmem:[%s2 + $0x17c] sm:$0xf]
    %v156 = vld [vmem:[%s2 + $0x180] sm:$0xf]
    %v157 = vld [vmem:[%s2 + $0x184] sm:$0xf]
    %v158 = vld [vmem:[%s3] sm:$0x1]
    %v160 = vlaneseq
    %v161 = vshrl.u32 %v160, 7
    %v162 = vsub.s32 0, %v161
    %v163 = vrot.slane %v158, %v162
    %v173 = vunpack.c.l.b16 %v52
    %v174 = vunpack.c.h.b16 %v52
    %v175 = vunpack.c.l.b16 %v53
    %v176 = vunpack.c.h.b16 %v53
    %v177 = vunpack.c.l.b16 %v54
    %v178 = vunpack.c.h.b16 %v54
    %v179 = vunpack.c.l.b16 %v55
    %v180 = vunpack.c.l.b16 %v56
    %v181 = vunpack.c.h.b16 %v56
    %v182 = vunpack.c.l.b16 %v57
    %v183 = vunpack.c.h.b16 %v57
    %v184 = vunpack.c.l.b16 %v58
    %v185 = vunpack.c.h.b16 %v58
    %v186 = vunpack.c.l.b16 %v59
    %v187 = vpack.c.b16 %v180, %v173
    %v188 = vpack.c.b16 %v181, %v174
    %v189 = vpack.c.b16 %v182, %v175
    %v190 = vpack.c.b16 %v183, %v176
    %v191 = vpack.c.b16 %v184, %v177
    %v192 = vpack.c.b16 %v185, %v178
    %v193 = vpack.c.b16 %v186, %v179
    %v298 = vunpack.c.l.b16 %v60
    %v299 = vunpack.c.l.b16 %v61
    %v300 = vunpack.c.l.b16 %v62
    %v301 = vunpack.c.l.b16 %v63
    %v302 = vunpack.c.l.b16 %v64
    %v303 = vunpack.c.l.b16 %v65
    %v304 = vunpack.c.l.b16 %v66
    %v305 = vunpack.c.l.b16 %v67
    %v306 = vunpack.c.l.b16 %v68
    %v307 = vunpack.c.l.b16 %v69
    %v308 = vunpack.c.l.b16 %v70
    %v309 = vunpack.c.l.b16 %v71
    %v310 = vunpack.c.l.b16 %v72
    %v311 = vunpack.c.l.b16 %v73
    %v312 = vunpack.c.l.b16 %v74
    %v313 = vunpack.c.l.b16 %v75
    %v314 = vunpack.c.l.b16 %v76
    %v315 = vunpack.c.l.b16 %v77
    %v316 = vunpack.c.l.b16 %v78
    %v317 = vunpack.c.l.b16 %v79
    %v318 = vunpack.c.l.b16 %v80
    %v319 = vunpack.c.l.b16 %v81
    %v320 = vunpack.c.l.b16 %v82
    %v321 = vunpack.c.l.b16 %v83
    %v322 = vunpack.c.l.b16 %v84
    %v323 = vunpack.c.l.b16 %v85
    %v324 = vunpack.c.l.b16 %v86
    %v325 = vunpack.c.l.b16 %v87
    %v326 = vunpack.c.l.b16 %v88
    %v327 = vunpack.c.l.b16 %v89
    %v328 = vunpack.c.l.b16 %v90
    %v329 = vunpack.c.l.b16 %v91
    %v330 = vunpack.c.l.b16 %v92
    %v331 = vunpack.c.l.b16 %v93
    %v332 = vunpack.c.l.b16 %v94
    %v333 = vunpack.c.l.b16 %v95
    %v334 = vunpack.c.l.b16 %v96
    %v335 = vunpack.c.l.b16 %v97
    %v336 = vunpack.c.l.b16 %v98
    %v337 = vunpack.c.l.b16 %v99
    %v338 = vunpack.c.l.b16 %v100
    %v339 = vunpack.c.l.b16 %v101
    %v340 = vunpack.c.l.b16 %v102
    %v341 = vunpack.c.l.b16 %v103
    %v342 = vunpack.c.l.b16 %v104
    %v343 = vunpack.c.l.b16 %v105
    %v344 = vunpack.c.l.b16 %v106
    %v345 = vunpack.c.l.b16 %v107
    %v346 = vunpack.c.l.b16 %v108
    %v347 = vunpack.c.l.b16 %v109
    %v348 = vunpack.c.l.b16 %v110
    %v349 = vunpack.c.l.b16 %v111
    %v350 = vunpack.c.l.b16 %v112
    %v351 = vunpack.c.l.b16 %v113
    %v352 = vunpack.c.l.b16 %v114
    %v353 = vunpack.c.l.b16 %v115
    %v354 = vunpack.c.l.b16 %v116
    %v355 = vunpack.c.l.b16 %v117
    %v356 = vunpack.c.l.b16 %v118
    %v357 = vunpack.c.l.b16 %v119
    %v358 = vunpack.c.l.b16 %v120
    %v359 = vunpack.c.l.b16 %v121
    %v360 = vunpack.c.l.b16 %v122
    %v361 = vunpack.c.l.b16 %v123
    %v362 = vunpack.c.l.b16 %v124
    %v363 = vunpack.c.l.b16 %v125
    %v364 = vunpack.c.l.b16 %v126
    %v365 = vunpack.c.l.b16 %v127
    %v366 = vunpack.c.l.b16 %v128
    %v367 = vunpack.c.l.b16 %v129
    %v368 = vunpack.c.l.b16 %v130
    %v369 = vunpack.c.l.b16 %v131
    %v370 = vunpack.c.l.b16 %v132
    %v371 = vunpack.c.l.b16 %v133
    %v372 = vunpack.c.l.b16 %v134
    %v373 = vunpack.c.l.b16 %v135
    %v374 = vunpack.c.l.b16 %v136
    %v375 = vunpack.c.l.b16 %v137
    %v376 = vunpack.c.l.b16 %v138
    %v377 = vunpack.c.l.b16 %v139
    %v378 = vunpack.c.l.b16 %v140
    %v379 = vunpack.c.l.b16 %v141
    %v380 = vunpack.c.l.b16 %v142
    %v381 = vunpack.c.l.b16 %v143
    %v382 = vunpack.c.l.b16 %v144
    %v383 = vunpack.c.l.b16 %v145
    %v384 = vunpack.c.l.b16 %v146
    %v385 = vunpack.c.l.b16 %v147
    %v386 = vunpack.c.l.b16 %v148
    %v387 = vunpack.c.l.b16 %v149
    %v388 = vunpack.c.l.b16 %v150
    %v389 = vunpack.c.l.b16 %v151
    %v390 = vunpack.c.l.b16 %v152
    %v391 = vunpack.c.l.b16 %v153
    %v392 = vunpack.c.l.b16 %v154
    %v393 = vunpack.c.l.b16 %v155
    %v394 = vunpack.c.l.b16 %v156
    %v395 = vunpack.c.l.b16 %v157
    %v396 = vpack.c.b16 %v299, %v298
    %v397 = vpack.c.b16 %v301, %v300
    %v398 = vpack.c.b16 %v303, %v302
    %v399 = vpack.c.b16 %v305, %v304
    %v400 = vpack.c.b16 %v307, %v306
    %v401 = vpack.c.b16 %v309, %v308
    %v402 = vpack.c.b16 %v311, %v310
    %v403 = vpack.c.b16 %v313, %v312
    %v404 = vpack.c.b16 %v315, %v314
    %v405 = vpack.c.b16 %v317, %v316
    %v406 = vpack.c.b16 %v319, %v318
    %v407 = vpack.c.b16 %v321, %v320
    %v408 = vpack.c.b16 %v323, %v322
    %v409 = vpack.c.b16 %v325, %v324
    %v410 = vpack.c.b16 %v327, %v326
    %v411 = vpack.c.b16 %v329, %v328
    %v412 = vpack.c.b16 %v331, %v330
    %v413 = vpack.c.b16 %v333, %v332
    %v414 = vpack.c.b16 %v335, %v334
    %v415 = vpack.c.b16 %v337, %v336
    %v416 = vpack.c.b16 %v339, %v338
    %v417 = vpack.c.b16 %v341, %v340
    %v418 = vpack.c.b16 %v343, %v342
    %v419 = vpack.c.b16 %v345, %v344
    %v420 = vpack.c.b16 %v347, %v346
    %v421 = vpack.c.b16 %v349, %v348
    %v422 = vpack.c.b16 %v351, %v350
    %v423 = vpack.c.b16 %v353, %v352
    %v424 = vpack.c.b16 %v355, %v354
    %v425 = vpack.c.b16 %v357, %v356
    %v426 = vpack.c.b16 %v359, %v358
    %v427 = vpack.c.b16 %v361, %v360
    %v428 = vpack.c.b16 %v363, %v362
    %v429 = vpack.c.b16 %v365, %v364
    %v430 = vpack.c.b16 %v367, %v366
    %v431 = vpack.c.b16 %v369, %v368
    %v432 = vpack.c.b16 %v371, %v370
    %v433 = vpack.c.b16 %v373, %v372
    %v434 = vpack.c.b16 %v375, %v374
    %v435 = vpack.c.b16 %v377, %v376
    %v436 = vpack.c.b16 %v379, %v378
    %v437 = vpack.c.b16 %v381, %v380
    %v438 = vpack.c.b16 %v383, %v382
    %v439 = vpack.c.b16 %v385, %v384
    %v440 = vpack.c.b16 %v387, %v386
    %v441 = vpack.c.b16 %v389, %v388
    %v442 = vpack.c.b16 %v391, %v390
    %v443 = vpack.c.b16 %v393, %v392
    %v444 = vpack.c.b16 %v395, %v394
    %vm494 = vcmask 130048
    %v496 = vsel %vm494, %v193, 0
    %498 = vmatprep.subr.bf16.mxu0 0
    %499 = vmatpush1.bf16.msra.mxu0 %v396
    %500 = vmatprep.subr.bf16.mxu0 0
    %501 = vmatpush1.bf16.msra.mxu0 %v397
    %502 = vmatprep.subr.bf16.mxu0 0
    %503 = vmatpush1.bf16.msra.mxu0 %v398
    %504 = vmatprep.subr.bf16.mxu0 0
    %505 = vmatpush1.bf16.msra.mxu0 %v399
    %506 = vmatprep.subr.bf16.mxu0 0
    %507 = vmatpush1.bf16.msra.mxu0 %v400
    %508 = vmatprep.subr.bf16.mxu0 0
    %509 = vmatpush1.bf16.msra.mxu0 %v401
    %510 = vmatprep.subr.bf16.mxu0 0
    %511 = vmatpush1.bf16.msra.mxu0 %v402
    %512 = vmatprep.subr.bf16.mxu0 0
    %513 = vmatpush1.bf16.msra.mxu0 %v403
    %514 = vmatprep.subr.bf16.mxu0 0
    %515 = vmatpush1.bf16.msra.mxu0 %v404
    %516 = vmatprep.subr.bf16.mxu0 0
    %517 = vmatpush1.bf16.msra.mxu0 %v405
    %518 = vmatprep.subr.bf16.mxu0 0
    %519 = vmatpush1.bf16.msra.mxu0 %v406
    %520 = vmatprep.subr.bf16.mxu0 0
    %521 = vmatpush1.bf16.msra.mxu0 %v407
    %522 = vmatprep.subr.bf16.mxu0 0
    %523 = vmatpush1.bf16.msra.mxu0 %v408
    %524 = vmatprep.subr.bf16.mxu0 0
    %525 = vmatpush1.bf16.msra.mxu0 %v409
    %526 = vmatprep.subr.bf16.mxu0 0
    %527 = vmatpush1.bf16.msra.mxu0 %v410
    %528 = vmatprep.subr.bf16.mxu0 0
    %529 = vmatpush1.bf16.msra.mxu0 %v411
    %530 = vmatprep.mubr.bf16.mxu0 %v188
    %531 = vmatmul.mubr.bf16.gmra.mrb[0].mxu0 %v187
    %v532 = vpop.f32.mrb[0].mxu0
    %v533 = vadd.f32 %v163, %v532
    %v534 = vpop.f32.mrb[0].mxu0
    %v535 = vpop.f32.mrb[0].mxu0
    %v536 = vadd.f32 %v163, %v535
    %v537 = vpop.f32.mrb[0].mxu0
    %538 = vdwg.mxu0
    %539 = vmatprep.subr.bf16.mxu0 0
    %540 = vmatpush1.bf16.msra.mxu0 %v412
    %541 = vmatprep.subr.bf16.mxu0 0
    %542 = vmatpush1.bf16.msra.mxu0 %v413
    %543 = vmatprep.subr.bf16.mxu0 0
    %544 = vmatpush1.bf16.msra.mxu0 %v414
    %545 = vmatprep.subr.bf16.mxu0 0
    %546 = vmatpush1.bf16.msra.mxu0 %v415
    %547 = vmatprep.subr.bf16.mxu0 0
    %548 = vmatpush1.bf16.msra.mxu0 %v416
    %549 = vmatprep.subr.bf16.mxu0 0
    %550 = vmatpush1.bf16.msra.mxu0 %v417
    %551 = vmatprep.subr.bf16.mxu0 0
    %552 = vmatpush1.bf16.msra.mxu0 %v418
    %553 = vmatprep.subr.bf16.mxu0 0
    %554 = vmatpush1.bf16.msra.mxu0 %v419
    %555 = vmatprep.subr.bf16.mxu0 0
    %556 = vmatpush1.bf16.msra.mxu0 %v420
    %557 = vmatprep.subr.bf16.mxu0 0
    %558 = vmatpush1.bf16.msra.mxu0 %v421
    %559 = vmatprep.subr.bf16.mxu0 0
    %560 = vmatpush1.bf16.msra.mxu0 %v422
    %561 = vmatprep.subr.bf16.mxu0 0
    %562 = vmatpush1.bf16.msra.mxu0 %v423
    %563 = vmatprep.subr.bf16.mxu0 0
    %564 = vmatpush1.bf16.msra.mxu0 %v424
    %565 = vmatprep.subr.bf16.mxu0 0
    %566 = vmatpush1.bf16.msra.mxu0 %v425
    %567 = vmatprep.subr.bf16.mxu0 0
    %568 = vmatpush1.bf16.msra.mxu0 %v426
    %569 = vmatprep.subr.bf16.mxu0 0
    %570 = vmatpush1.bf16.msra.mxu0 %v427
    %571 = vmatprep.mubr.bf16.mxu0 %v190
    %572 = vmatmul.mubr.bf16.gmra.mrb[0].mxu0 %v189
    %v573 = vpop.f32.mrb[0].mxu0
    %v574 = vadd.f32 %v533, %v573
    %v575 = vpop.f32.mrb[0].mxu0
    %v576 = vpop.f32.mrb[0].mxu0
    %v577 = vadd.f32 %v536, %v576
    %v578 = vpop.f32.mrb[0].mxu0
    %579 = vdwg.mxu0
    %580 = vmatprep.subr.bf16.mxu0 0
    %581 = vmatpush1.bf16.msra.mxu0 %v428
    %582 = vmatprep.subr.bf16.mxu0 0
    %583 = vmatpush1.bf16.msra.mxu0 %v429
    %584 = vmatprep.subr.bf16.mxu0 0
    %585 = vmatpush1.bf16.msra.mxu0 %v430
    %586 = vmatprep.subr.bf16.mxu0 0
    %587 = vmatpush1.bf16.msra.mxu0 %v431
    %588 = vmatprep.subr.bf16.mxu0 0
    %589 = vmatpush1.bf16.msra.mxu0 %v432
    %590 = vmatprep.subr.bf16.mxu0 0
    %591 = vmatpush1.bf16.msra.mxu0 %v433
    %592 = vmatprep.subr.bf16.mxu0 0
    %593 = vmatpush1.bf16.msra.mxu0 %v434
    %594 = vmatprep.subr.bf16.mxu0 0
    %595 = vmatpush1.bf16.msra.mxu0 %v435
    %596 = vmatprep.subr.bf16.mxu0 0
    %597 = vmatpush1.bf16.msra.mxu0 %v436
    %598 = vmatprep.subr.bf16.mxu0 0
    %599 = vmatpush1.bf16.msra.mxu0 %v437
    %600 = vmatprep.subr.bf16.mxu0 0
    %601 = vmatpush1.bf16.msra.mxu0 %v438
    %602 = vmatprep.subr.bf16.mxu0 0
    %603 = vmatpush1.bf16.msra.mxu0 %v439
    %604 = vmatprep.subr.bf16.mxu0 0
    %605 = vmatpush1.bf16.msra.mxu0 %v440
    %606 = vmatprep.subr.bf16.mxu0 0
    %607 = vmatpush1.bf16.msra.mxu0 %v441
    %608 = vmatprep.subr.bf16.mxu0 0
    %609 = vmatpush1.bf16.msra.mxu0 %v442
    %610 = vmatprep.subr.bf16.mxu0 0
    %611 = vmatpush1.bf16.msra.mxu0 %v443
    %612 = vmatprep.mubr.bf16.mxu0 %v192
    %613 = vmatmul.mubr.bf16.gmra.mrb[0].mxu0 %v191
    %v614 = vpop.f32.mrb[0].mxu0
    %v615 = vadd.f32 %v574, %v614
    %v616 = vpop.f32.mrb[0].mxu0
    %v617 = vpop.f32.mrb[0].mxu0
    %v618 = vadd.f32 %v577, %v617
    %v619 = vpop.f32.mrb[0].mxu0
    %620 = vdwg.mxu0
    %621 = vmatprep.subr.bf16.mxu0 0
    %622 = vmatpush1.bf16.msra.mxu0 %v444
    %623 = vmatprep.subr.bf16.mxu0 0
    %624 = vmatpush1.bf16.msra.mxu0 0
    %625 = vmatprep.subr.bf16.mxu0 0
    %626 = vmatpush1.bf16.msra.mxu0 0
    %627 = vmatprep.subr.bf16.mxu0 0
    %628 = vmatpush1.bf16.msra.mxu0 0
    %629 = vmatprep.subr.bf16.mxu0 0
    %630 = vmatpush1.bf16.msra.mxu0 0
    %631 = vmatprep.subr.bf16.mxu0 0
    %632 = vmatpush1.bf16.msra.mxu0 0
    %633 = vmatprep.subr.bf16.mxu0 0
    %634 = vmatpush1.bf16.msra.mxu0 0
    %635 = vmatprep.subr.bf16.mxu0 0
    %636 = vmatpush1.bf16.msra.mxu0 0
    %637 = vmatprep.subr.bf16.mxu0 0
    %638 = vmatpush1.bf16.msra.mxu0 0
    %639 = vmatprep.subr.bf16.mxu0 0
    %640 = vmatpush1.bf16.msra.mxu0 0
    %641 = vmatprep.subr.bf16.mxu0 0
    %642 = vmatpush1.bf16.msra.mxu0 0
    %643 = vmatprep.subr.bf16.mxu0 0
    %644 = vmatpush1.bf16.msra.mxu0 0
    %645 = vmatprep.subr.bf16.mxu0 0
    %646 = vmatpush1.bf16.msra.mxu0 0
    %647 = vmatprep.subr.bf16.mxu0 0
    %648 = vmatpush1.bf16.msra.mxu0 0
    %649 = vmatprep.subr.bf16.mxu0 0
    %650 = vmatpush1.bf16.msra.mxu0 0
    %651 = vmatprep.subr.bf16.mxu0 0
    %652 = vmatpush1.bf16.msra.mxu0 0
    %653 = vmatprep.mubr.bf16.mxu0 0
    %654 = vmatmul.mubr.bf16.gmra.mrb[0].mxu0 %v496
    %v655 = vpop.f32.mrb[0].mxu0
    %v656 = vadd.f32 %v615, %v655
    %v657 = vpop.f32.mrb[0].mxu0
    %v658 = vpop.f32.mrb[0].mxu0
    %v659 = vadd.f32 %v618, %v658
    %v660 = vpop.f32.mrb[0].mxu0
    %661 = vdwg.mxu0
    %v662 = vmax.f32 %v656, 0.0
    %v663 = vmax.f32 %v659, 0.0
    %v664 = vpack.c.bf16 %v663, %v662
    %v665 = vld [vmem:[%s4] sm:$0xf]
    %v666 = vld [vmem:[%s4 + $0x4] sm:$0xf]
    %v667 = vld [vmem:[%s4 + $0x8] sm:$0xf]
    %v668 = vld [vmem:[%s4 + $0xc] sm:$0xf]
    %v669 = vld [vmem:[%s4 + $0x10] sm:$0xf]
    %v670 = vld [vmem:[%s4 + $0x14] sm:$0xf]
    %v671 = vld [vmem:[%s4 + $0x18] sm:$0xf]
    %v672 = vld [vmem:[%s4 + $0x1c] sm:$0xf]
    %v673 = vld [vmem:[%s5] sm:$0x1]
    %v675 = vlaneseq
    %v676 = vshrl.u32 %v675, 7
    %v677 = vsub.s32 0, %v676
    %v678 = vrot.slane %v673, %v677
    %v688 = vunpack.c.l.b16 %v665
    %v689 = vunpack.c.l.b16 %v666
    %v690 = vunpack.c.l.b16 %v667
    %v691 = vunpack.c.l.b16 %v668
    %v692 = vunpack.c.l.b16 %v669
    %v693 = vunpack.c.l.b16 %v670
    %v694 = vunpack.c.l.b16 %v671
    %v695 = vunpack.c.l.b16 %v672
    %v696 = vpack.c.b16 %v689, %v688
    %v697 = vpack.c.b16 %v691, %v690
    %v698 = vpack.c.b16 %v693, %v692
    %v699 = vpack.c.b16 %v695, %v694
    %vm704 = vcmask 523264
    %v706 = vsel %vm704, %v664, 0
    %708 = vmatprep.subr.bf16.mxu0 0
    %709 = vmatpush1.bf16.msra.mxu0 %v696
    %710 = vmatprep.subr.bf16.mxu0 0
    %711 = vmatpush1.bf16.msra.mxu0 %v697
    %712 = vmatprep.subr.bf16.mxu0 0
    %713 = vmatpush1.bf16.msra.mxu0 %v698
    %714 = vmatprep.subr.bf16.mxu0 0
    %715 = vmatpush1.bf16.msra.mxu0 %v699
    %716 = vmatprep.subr.bf16.mxu0 0
    %717 = vmatpush1.bf16.msra.mxu0 0
    %718 = vmatprep.subr.bf16.mxu0 0
    %719 = vmatpush1.bf16.msra.mxu0 0
    %720 = vmatprep.subr.bf16.mxu0 0
    %721 = vmatpush1.bf16.msra.mxu0 0
    %722 = vmatprep.subr.bf16.mxu0 0
    %723 = vmatpush1.bf16.msra.mxu0 0
    %724 = vmatprep.subr.bf16.mxu0 0
    %725 = vmatpush1.bf16.msra.mxu0 0
    %726 = vmatprep.subr.bf16.mxu0 0
    %727 = vmatpush1.bf16.msra.mxu0 0
    %728 = vmatprep.subr.bf16.mxu0 0
    %729 = vmatpush1.bf16.msra.mxu0 0
    %730 = vmatprep.subr.bf16.mxu0 0
    %731 = vmatpush1.bf16.msra.mxu0 0
    %732 = vmatprep.subr.bf16.mxu0 0
    %733 = vmatpush1.bf16.msra.mxu0 0
    %734 = vmatprep.subr.bf16.mxu0 0
    %735 = vmatpush1.bf16.msra.mxu0 0
    %736 = vmatprep.subr.bf16.mxu0 0
    %737 = vmatpush1.bf16.msra.mxu0 0
    %738 = vmatprep.subr.bf16.mxu0 0
    %739 = vmatpush1.bf16.msra.mxu0 0
    %740 = vmatprep.mubr.bf16.mxu0 0
    %741 = vmatmul.mubr.bf16.gmra.mrb[0].mxu0 %v706
    %v742 = vpop.f32.mrb[0].mxu0
    %v743 = vadd.f32 %v678, %v742
    %v744 = vpop.f32.mrb[0].mxu0
    %v745 = vpop.f32.mrb[0].mxu0
    %v746 = vadd.f32 %v678, %v745
    %v747 = vpop.f32.mrb[0].mxu0
    %748 = vdwg.mxu0
    %v749 = vmax.f32 %v743, 0.0
    %v750 = vmax.f32 %v746, 0.0
    %v751 = vpack.c.bf16 %v750, %v749
    %v752 = vld [vmem:[%s6] sm:$0xf]
    %v753 = vld [vmem:[%s6 + $0x4] sm:$0xf]
    %v754 = vld [vmem:[%s6 + $0x8] sm:$0xf]
    %v755 = vld [vmem:[%s6 + $0xc] sm:$0xf]
    %v756 = vld [vmem:[%s7] sm:$0x1]
    %v758 = vlaneseq
    %v759 = vshrl.u32 %v758, 7
    %v760 = vsub.s32 0, %v759
    %v761 = vrot.slane %v756, %v760
    %v767 = vunpack.c.l.b16 %v752
    %v768 = vunpack.c.l.b16 %v753
    %v769 = vunpack.c.l.b16 %v754
    %v770 = vunpack.c.l.b16 %v755
    %v771 = vpack.c.b16 %v768, %v767
    %v772 = vpack.c.b16 %v770, %v769
    %vm775 = vcmask 261120
    %v777 = vsel %vm775, %v751, 0
    %779 = vmatprep.subr.bf16.mxu0 0
    %780 = vmatpush1.bf16.msra.mxu0 %v771
    %781 = vmatprep.subr.bf16.mxu0 0
    %782 = vmatpush1.bf16.msra.mxu0 %v772
    %783 = vmatprep.subr.bf16.mxu0 0
    %784 = vmatpush1.bf16.msra.mxu0 0
    %785 = vmatprep.subr.bf16.mxu0 0
    %786 = vmatpush1.bf16.msra.mxu0 0
    %787 = vmatprep.subr.bf16.mxu0 0
    %788 = vmatpush1.bf16.msra.mxu0 0
    %789 = vmatprep.subr.bf16.mxu0 0
    %790 = vmatpush1.bf16.msra.mxu0 0
    %791 = vmatprep.subr.bf16.mxu0 0
    %792 = vmatpush1.bf16.msra.mxu0 0
    %793 = vmatprep.subr.bf16.mxu0 0
    %794 = vmatpush1.bf16.msra.mxu0 0
    %795 = vmatprep.subr.bf16.mxu0 0
    %796 = vmatpush1.bf16.msra.mxu0 0
    %797 = vmatprep.subr.bf16.mxu0 0
    %798 = vmatpush1.bf16.msra.mxu0 0
    %799 = vmatprep.subr.bf16.mxu0 0
    %800 = vmatpush1.bf16.msra.mxu0 0
    %801 = vmatprep.subr.bf16.mxu0 0
    %802 = vmatpush1.bf16.msra.mxu0 0
    %803 = vmatprep.subr.bf16.mxu0 0
    %804 = vmatpush1.bf16.msra.mxu0 0
    %805 = vmatprep.subr.bf16.mxu0 0
    %806 = vmatpush1.bf16.msra.mxu0 0
    %807 = vmatprep.subr.bf16.mxu0 0
    %808 = vmatpush1.bf16.msra.mxu0 0
    %809 = vmatprep.subr.bf16.mxu0 0
    %810 = vmatpush1.bf16.msra.mxu0 0
    %811 = vmatprep.mubr.bf16.mxu0 0
    %812 = vmatmul.mubr.bf16.gmra.mrb[0].mxu0 %v777
    %v813 = vpop.f32.mrb[0].mxu0
    %v814 = vadd.f32 %v761, %v813
    %v815 = vpop.f32.mrb[0].mxu0
    %v816 = vpop.f32.mrb[0].mxu0
    %v817 = vadd.f32 %v761, %v816
    %v818 = vpop.f32.mrb[0].mxu0
    %819 = vdwg.mxu0
    %v820 = vmul.f32 %v814, 0.5
    %v821 = vmul.f32 %v817, 0.5
    %v822 = vmul.f32 %v820, 1.442695
    %v823 = vpow.pop %v822
    %v824 = vmul.f32 %v821, 1.442695
    %v825 = vpow.pop %v824
    %v826 = vld [vmem:[%s1] sm:$0xff]
    %v827 = vld [vmem:[%s1 + $0x8] sm:$0xff]
    %830 = vrot.lane.b32.xlu0 %v823, 126
    %v831 = vpop.permute.xlu0 %830
    %832 = vrot.lane.b32.xlu0 %v825, 126
    %v833 = vpop.permute.xlu0 %832
    %v836 = vmul.f32 %v826, %v831
    %v837 = vmul.f32 %v827, %v833
    %v838 = vadd.f32 %v836, %v814
    %v839 = vadd.f32 %v837, %v817
    %v840 = vpack.c.bf16 %v839, %v838
    %v841 = vld [vmem:[%s8] sm:$0x1]
    %v842 = vld [vmem:[%s9] sm:$0x1]
    %v844 = vlaneseq
    %v845 = vshrl.u32 %v844, 7
    %v846 = vsub.s32 0, %v845
    %v847 = vrot.slane %v842, %v846
    %vm849 = vcmask 15360
    %v851 = vsel %vm849, %v840, 0
    %vm853 = vcmask 1040384
    %v855 = vsel %vm853, %v841, 0
    %857 = vmatprep.subr.bf16.mxu0 0
    %858 = vmatpush1.bf16.msra.mxu0 %v855
    %859 = vmatprep.subr.bf16.mxu0 0
    %860 = vmatpush1.bf16.msra.mxu0 0
    %861 = vmatprep.subr.bf16.mxu0 0
    %862 = vmatpush1.bf16.msra.mxu0 0
    %863 = vmatprep.subr.bf16.mxu0 0
    %864 = vmatpush1.bf16.msra.mxu0 0
    %865 = vmatprep.subr.bf16.mxu0 0
    %866 = vmatpush1.bf16.msra.mxu0 0
    %867 = vmatprep.subr.bf16.mxu0 0
    %868 = vmatpush1.bf16.msra.mxu0 0
    %869 = vmatprep.subr.bf16.mxu0 0
    %870 = vmatpush1.bf16.msra.mxu0 0
    %871 = vmatprep.subr.bf16.mxu0 0
    %872 = vmatpush1.bf16.msra.mxu0 0
    %873 = vmatprep.subr.bf16.mxu0 0
    %874 = vmatpush1.bf16.msra.mxu0 0
    %875 = vmatprep.subr.bf16.mxu0 0
    %876 = vmatpush1.bf16.msra.mxu0 0
    %877 = vmatprep.subr.bf16.mxu0 0
    %878 = vmatpush1.bf16.msra.mxu0 0
    %879 = vmatprep.subr.bf16.mxu0 0
    %880 = vmatpush1.bf16.msra.mxu0 0
    %881 = vmatprep.subr.bf16.mxu0 0
    %882 = vmatpush1.bf16.msra.mxu0 0
    %883 = vmatprep.subr.bf16.mxu0 0
    %884 = vmatpush1.bf16.msra.mxu0 0
    %885 = vmatprep.subr.bf16.mxu0 0
    %886 = vmatpush1.bf16.msra.mxu0 0
    %887 = vmatprep.subr.bf16.mxu0 0
    %888 = vmatpush1.bf16.msra.mxu0 0
    %889 = vmatprep.mubr.bf16.mxu0 0
    %890 = vmatmul.mubr.bf16.gmra.mrb[0].mxu0 %v851
    %v891 = vpop.f32.mrb[0].mxu0
    %v892 = vadd.f32 %v847, %v891
    %v893 = vpop.f32.mrb[0].mxu0
    %v894 = vpop.f32.mrb[0].mxu0
    %v895 = vadd.f32 %v847, %v894
    %v896 = vpop.f32.mrb[0].mxu0
    %897 = vdwg.mxu0
    %v898 = vmax.f32 %v892, 0.0
    %v899 = vmax.f32 %v895, 0.0
    %v900 = vpack.c.bf16 %v899, %v898
    %v901 = vld [vmem:[%s10] sm:$0xf]
    %v902 = vld [vmem:[%s10 + $0x4] sm:$0xf]
    %v903 = vld [vmem:[%s10 + $0x8] sm:$0xf]
    %v904 = vld [vmem:[%s10 + $0xc] sm:$0xf]
    %v905 = vld [vmem:[%s11] sm:$0x1]
    %v907 = vlaneseq
    %v908 = vshrl.u32 %v907, 7
    %v909 = vsub.s32 0, %v908
    %v910 = vrot.slane %v905, %v909
    %v916 = vunpack.c.l.b16 %v901
    %v917 = vunpack.c.l.b16 %v902
    %v918 = vunpack.c.l.b16 %v903
    %v919 = vunpack.c.l.b16 %v904
    %v920 = vpack.c.b16 %v917, %v916
    %v921 = vpack.c.b16 %v919, %v918
    %v925 = vsel %vm775, %v900, 0
    %927 = vmatprep.subr.bf16.mxu0 0
    %928 = vmatpush1.bf16.msra.mxu0 %v920
    %929 = vmatprep.subr.bf16.mxu0 0
    %930 = vmatpush1.bf16.msra.mxu0 %v921
    %931 = vmatprep.subr.bf16.mxu0 0
    %932 = vmatpush1.bf16.msra.mxu0 0
    %933 = vmatprep.subr.bf16.mxu0 0
    %934 = vmatpush1.bf16.msra.mxu0 0
    %935 = vmatprep.subr.bf16.mxu0 0
    %936 = vmatpush1.bf16.msra.mxu0 0
    %937 = vmatprep.subr.bf16.mxu0 0
    %938 = vmatpush1.bf16.msra.mxu0 0
    %939 = vmatprep.subr.bf16.mxu0 0
    %940 = vmatpush1.bf16.msra.mxu0 0
    %941 = vmatprep.subr.bf16.mxu0 0
    %942 = vmatpush1.bf16.msra.mxu0 0
    %943 = vmatprep.subr.bf16.mxu0 0
    %944 = vmatpush1.bf16.msra.mxu0 0
    %945 = vmatprep.subr.bf16.mxu0 0
    %946 = vmatpush1.bf16.msra.mxu0 0
    %947 = vmatprep.subr.bf16.mxu0 0
    %948 = vmatpush1.bf16.msra.mxu0 0
    %949 = vmatprep.subr.bf16.mxu0 0
    %950 = vmatpush1.bf16.msra.mxu0 0
    %951 = vmatprep.subr.bf16.mxu0 0
    %952 = vmatpush1.bf16.msra.mxu0 0
    %953 = vmatprep.subr.bf16.mxu0 0
    %954 = vmatpush1.bf16.msra.mxu0 0
    %955 = vmatprep.subr.bf16.mxu0 0
    %956 = vmatpush1.bf16.msra.mxu0 0
    %957 = vmatprep.subr.bf16.mxu0 0
    %958 = vmatpush1.bf16.msra.mxu0 0
    %959 = vmatprep.mubr.bf16.mxu0 0
    %960 = vmatmul.mubr.bf16.gmra.mrb[0].mxu0 %v925
    %v961 = vpop.f32.mrb[0].mxu0
    %v962 = vadd.f32 %v910, %v961
    %v963 = vpop.f32.mrb[0].mxu0
    %v964 = vpop.f32.mrb[0].mxu0
    %v965 = vadd.f32 %v910, %v964
    %v966 = vpop.f32.mrb[0].mxu0
    %967 = vdwg.mxu0
    %v968 = vmax.f32 %v962, 0.0
    %v969 = vmax.f32 %v965, 0.0
    %v970 = vpack.c.bf16 %v969, %v968
    %v971 = vld [vmem:[%s12] sm:$0xff]
    %v972 = vld [vmem:[%s12 + $0x8] sm:$0xff]
    %v973 = vld [vmem:[%s12 + $0x10] sm:$0xff]
    %v974 = vld [vmem:[%s12 + $0x18] sm:$0xf]
    %v975 = vld [vmem:[%s12 + $0x1c] sm:$0xff]
    %v976 = vld [vmem:[%s12 + $0x24] sm:$0xff]
    %v977 = vld [vmem:[%s12 + $0x2c] sm:$0xff]
    %v978 = vld [vmem:[%s12 + $0x34] sm:$0xf]
    %v979 = vld [vmem:[%s12 + $0x38] sm:$0xff]
    %v980 = vld [vmem:[%s12 + $0x40] sm:$0xff]
    %v981 = vld [vmem:[%s12 + $0x48] sm:$0xff]
    %v982 = vld [vmem:[%s12 + $0x50] sm:$0xf]
    %v983 = vld [vmem:[%s12 + $0x54] sm:$0xff]
    %v984 = vld [vmem:[%s12 + $0x5c] sm:$0xff]
    %v985 = vld [vmem:[%s12 + $0x64] sm:$0xff]
    %v986 = vld [vmem:[%s12 + $0x6c] sm:$0xf]
    %v987 = vld [vmem:[%s12 + $0x70] sm:$0xff]
    %v988 = vld [vmem:[%s12 + $0x78] sm:$0xff]
    %v989 = vld [vmem:[%s12 + $0x80] sm:$0xff]
    %v990 = vld [vmem:[%s12 + $0x88] sm:$0xf]
    %v991 = vld [vmem:[%s12 + $0x8c] sm:$0xff]
    %v992 = vld [vmem:[%s12 + $0x94] sm:$0xff]
    %v993 = vld [vmem:[%s12 + $0x9c] sm:$0xff]
    %v994 = vld [vmem:[%s12 + $0xa4] sm:$0xf]
    %v995 = vld [vmem:[%s12 + $0xa8] sm:$0xff]
    %v996 = vld [vmem:[%s12 + $0xb0] sm:$0xff]
    %v997 = vld [vmem:[%s12 + $0xb8] sm:$0xff]
    %v998 = vld [vmem:[%s12 + $0xc0] sm:$0xf]
    %v999 = vld [vmem:[%s12 + $0xc4] sm:$0xff]
    %v1000 = vld [vmem:[%s12 + $0xcc] sm:$0xff]
    %v1001 = vld [vmem:[%s12 + $0xd4] sm:$0xff]
    %v1002 = vld [vmem:[%s12 + $0xdc] sm:$0xf]
    %v1003 = vld [vmem:[%s13] sm:$0xff]
    %v1005 = vlaneseq
    %v1006 = vshrl.u32 %v1005, 7
    %v1007 = vsub.s32 0, %v1006
    %v1008 = vrot.slane %v1003, %v1007
    %v1009 = vlaneseq
    %v1010 = vshrl.u32 %v1009, 7
    %v1011 = vsub.s32 1, %v1010
    %v1012 = vrot.slane %v1003, %v1011
    %v1013 = vlaneseq
    %v1014 = vshrl.u32 %v1013, 7
    %v1015 = vsub.s32 2, %v1014
    %v1016 = vrot.slane %v1003, %v1015
    %v1017 = vlaneseq
    %v1018 = vshrl.u32 %v1017, 7
    %v1019 = vsub.s32 3, %v1018
    %v1020 = vrot.slane %v1003, %v1019
    %v1021 = vlaneseq
    %v1022 = vshrl.u32 %v1021, 7
    %v1023 = vsub.s32 4, %v1022
    %v1024 = vrot.slane %v1003, %v1023
    %v1025 = vlaneseq
    %v1026 = vshrl.u32 %v1025, 7
    %v1027 = vsub.s32 5, %v1026
    %v1028 = vrot.slane %v1003, %v1027
    %v1029 = vlaneseq
    %v1030 = vshrl.u32 %v1029, 7
    %v1031 = vsub.s32 6, %v1030
    %v1032 = vrot.slane %v1003, %v1031
    %v1072 = vunpack.c.l.b16 %v971
    %v1073 = vunpack.c.h.b16 %v971
    %v1074 = vunpack.c.l.b16 %v972
    %v1075 = vunpack.c.h.b16 %v972
    %v1076 = vunpack.c.l.b16 %v973
    %v1077 = vunpack.c.h.b16 %v973
    %v1078 = vunpack.c.l.b16 %v974
    %v1079 = vunpack.c.l.b16 %v975
    %v1080 = vunpack.c.h.b16 %v975
    %v1081 = vunpack.c.l.b16 %v976
    %v1082 = vunpack.c.h.b16 %v976
    %v1083 = vunpack.c.l.b16 %v977
    %v1084 = vunpack.c.h.b16 %v977
    %v1085 = vunpack.c.l.b16 %v978
    %v1086 = vunpack.c.l.b16 %v979
    %v1087 = vunpack.c.h.b16 %v979
    %v1088 = vunpack.c.l.b16 %v980
    %v1089 = vunpack.c.h.b16 %v980
    %v1090 = vunpack.c.l.b16 %v981
    %v1091 = vunpack.c.h.b16 %v981
    %v1092 = vunpack.c.l.b16 %v982
    %v1093 = vunpack.c.l.b16 %v983
    %v1094 = vunpack.c.h.b16 %v983
    %v1095 = vunpack.c.l.b16 %v984
    %v1096 = vunpack.c.h.b16 %v984
    %v1097 = vunpack.c.l.b16 %v985
    %v1098 = vunpack.c.h.b16 %v985
    %v1099 = vunpack.c.l.b16 %v986
    %v1100 = vunpack.c.l.b16 %v987
    %v1101 = vunpack.c.h.b16 %v987
    %v1102 = vunpack.c.l.b16 %v988
    %v1103 = vunpack.c.h.b16 %v988
    %v1104 = vunpack.c.l.b16 %v989
    %v1105 = vunpack.c.h.b16 %v989
    %v1106 = vunpack.c.l.b16 %v990
    %v1107 = vunpack.c.l.b16 %v991
    %v1108 = vunpack.c.h.b16 %v991
    %v1109 = vunpack.c.l.b16 %v992
    %v1110 = vunpack.c.h.b16 %v992
    %v1111 = vunpack.c.l.b16 %v993
    %v1112 = vunpack.c.h.b16 %v993
    %v1113 = vunpack.c.l.b16 %v994
    %v1114 = vunpack.c.l.b16 %v995
    %v1115 = vunpack.c.h.b16 %v995
    %v1116 = vunpack.c.l.b16 %v996
    %v1117 = vunpack.c.h.b16 %v996
    %v1118 = vunpack.c.l.b16 %v997
    %v1119 = vunpack.c.h.b16 %v997
    %v1120 = vunpack.c.l.b16 %v998
    %v1121 = vunpack.c.l.b16 %v999
    %v1122 = vunpack.c.h.b16 %v999
    %v1123 = vunpack.c.l.b16 %v1000
    %v1124 = vunpack.c.h.b16 %v1000
    %v1125 = vunpack.c.l.b16 %v1001
    %v1126 = vunpack.c.h.b16 %v1001
    %v1127 = vunpack.c.l.b16 %v1002
    %v1128 = vpack.c.b16 %v1079, %v1072
    %v1129 = vpack.c.b16 %v1080, %v1073
    %v1130 = vpack.c.b16 %v1081, %v1074
    %v1131 = vpack.c.b16 %v1082, %v1075
    %v1132 = vpack.c.b16 %v1083, %v1076
    %v1133 = vpack.c.b16 %v1084, %v1077
    %v1134 = vpack.c.b16 %v1085, %v1078
    %v1135 = vpack.c.b16 %v1093, %v1086
    %v1136 = vpack.c.b16 %v1094, %v1087
    %v1137 = vpack.c.b16 %v1095, %v1088
    %v1138 = vpack.c.b16 %v1096, %v1089
    %v1139 = vpack.c.b16 %v1097, %v1090
    %v1140 = vpack.c.b16 %v1098, %v1091
    %v1141 = vpack.c.b16 %v1099, %v1092
    %v1142 = vpack.c.b16 %v1107, %v1100
    %v1143 = vpack.c.b16 %v1108, %v1101
    %v1144 = vpack.c.b16 %v1109, %v1102
    %v1145 = vpack.c.b16 %v1110, %v1103
    %v1146 = vpack.c.b16 %v1111, %v1104
    %v1147 = vpack.c.b16 %v1112, %v1105
    %v1148 = vpack.c.b16 %v1113, %v1106
    %v1149 = vpack.c.b16 %v1121, %v1114
    %v1150 = vpack.c.b16 %v1122, %v1115
    %v1151 = vpack.c.b16 %v1123, %v1116
    %v1152 = vpack.c.b16 %v1124, %v1117
    %v1153 = vpack.c.b16 %v1125, %v1118
    %v1154 = vpack.c.b16 %v1126, %v1119
    %v1155 = vpack.c.b16 %v1127, %v1120
    %v1185 = vsel %vm704, %v970, 0
    %1187 = vmatprep.subr.bf16.mxu0 %v1129
    %1188 = vmatpush1.bf16.msra.mxu0 %v1128
    %1189 = vmatprep.subr.bf16.mxu0 %v1136
    %1190 = vmatpush1.bf16.msra.mxu0 %v1135
    %1191 = vmatprep.subr.bf16.mxu0 %v1143
    %1192 = vmatpush1.bf16.msra.mxu0 %v1142
    %1193 = vmatprep.subr.bf16.mxu0 %v1150
    %1194 = vmatpush1.bf16.msra.mxu0 %v1149
    %1195 = vmatprep.subr.bf16.mxu0 0
    %1196 = vmatpush1.bf16.msra.mxu0 0
    %1197 = vmatprep.subr.bf16.mxu0 0
    %1198 = vmatpush1.bf16.msra.mxu0 0
    %1199 = vmatprep.subr.bf16.mxu0 0
    %1200 = vmatpush1.bf16.msra.mxu0 0
    %1201 = vmatprep.subr.bf16.mxu0 0
    %1202 = vmatpush1.bf16.msra.mxu0 0
    %1203 = vmatprep.subr.bf16.mxu0 0
    %1204 = vmatpush1.bf16.msra.mxu0 0
    %1205 = vmatprep.subr.bf16.mxu0 0
    %1206 = vmatpush1.bf16.msra.mxu0 0
    %1207 = vmatprep.subr.bf16.mxu0 0
    %1208 = vmatpush1.bf16.msra.mxu0 0
    %1209 = vmatprep.subr.bf16.mxu0 0
    %1210 = vmatpush1.bf16.msra.mxu0 0
    %1211 = vmatprep.subr.bf16.mxu0 0
    %1212 = vmatpush1.bf16.msra.mxu0 0
    %1213 = vmatprep.subr.bf16.mxu0 0
    %1214 = vmatpush1.bf16.msra.mxu0 0
    %1215 = vmatprep.subr.bf16.mxu0 0
    %1216 = vmatpush1.bf16.msra.mxu0 0
    %1217 = vmatprep.subr.bf16.mxu0 0
    %1218 = vmatpush1.bf16.msra.mxu0 0
    %1219 = vmatprep.mubr.bf16.mxu0 0
    %1220 = vmatmul.mubr.bf16.gmra.mrb[0].mxu0 %v1185
    %v1221 = vpop.f32.mrb[0].mxu0
    %v1222 = vadd.f32 %v1008, %v1221
    %v1223 = vpop.f32.mrb[0].mxu0
    %v1224 = vadd.f32 %v1012, %v1223
    %v1225 = vpop.f32.mrb[0].mxu0
    %v1226 = vadd.f32 %v1008, %v1225
    %v1227 = vpop.f32.mrb[0].mxu0
    %v1228 = vadd.f32 %v1012, %v1227
    %1229 = vdwg.mxu0
    %1230 = vmatprep.subr.bf16.mxu0 %v1131
    %1231 = vmatpush1.bf16.msra.mxu0 %v1130
    %1232 = vmatprep.subr.bf16.mxu0 %v1138
    %1233 = vmatpush1.bf16.msra.mxu0 %v1137
    %1234 = vmatprep.subr.bf16.mxu0 %v1145
    %1235 = vmatpush1.bf16.msra.mxu0 %v1144
    %1236 = vmatprep.subr.bf16.mxu0 %v1152
    %1237 = vmatpush1.bf16.msra.mxu0 %v1151
    %1238 = vmatprep.subr.bf16.mxu0 0
    %1239 = vmatpush1.bf16.msra.mxu0 0
    %1240 = vmatprep.subr.bf16.mxu0 0
    %1241 = vmatpush1.bf16.msra.mxu0 0
    %1242 = vmatprep.subr.bf16.mxu0 0
    %1243 = vmatpush1.bf16.msra.mxu0 0
    %1244 = vmatprep.subr.bf16.mxu0 0
    %1245 = vmatpush1.bf16.msra.mxu0 0
    %1246 = vmatprep.subr.bf16.mxu0 0
    %1247 = vmatpush1.bf16.msra.mxu0 0
    %1248 = vmatprep.subr.bf16.mxu0 0
    %1249 = vmatpush1.bf16.msra.mxu0 0
    %1250 = vmatprep.subr.bf16.mxu0 0
    %1251 = vmatpush1.bf16.msra.mxu0 0
    %1252 = vmatprep.subr.bf16.mxu0 0
    %1253 = vmatpush1.bf16.msra.mxu0 0
    %1254 = vmatprep.subr.bf16.mxu0 0
    %1255 = vmatpush1.bf16.msra.mxu0 0
    %1256 = vmatprep.subr.bf16.mxu0 0
    %1257 = vmatpush1.bf16.msra.mxu0 0
    %1258 = vmatprep.subr.bf16.mxu0 0
    %1259 = vmatpush1.bf16.msra.mxu0 0
    %1260 = vmatprep.subr.bf16.mxu0 0
    %1261 = vmatpush1.bf16.msra.mxu0 0
    %1262 = vmatprep.mubr.bf16.mxu0 0
    %1263 = vmatmul.mubr.bf16.gmra.mrb[0].mxu0 %v1185
    %v1264 = vpop.f32.mrb[0].mxu0
    %v1265 = vadd.f32 %v1016, %v1264
    %v1266 = vpop.f32.mrb[0].mxu0
    %v1267 = vadd.f32 %v1020, %v1266
    %v1268 = vpop.f32.mrb[0].mxu0
    %v1269 = vadd.f32 %v1016, %v1268
    %v1270 = vpop.f32.mrb[0].mxu0
    %v1271 = vadd.f32 %v1020, %v1270
    %1272 = vdwg.mxu0
    %1273 = vmatprep.subr.bf16.mxu0 %v1133
    %1274 = vmatpush1.bf16.msra.mxu0 %v1132
    %1275 = vmatprep.subr.bf16.mxu0 %v1140
    %1276 = vmatpush1.bf16.msra.mxu0 %v1139
    %1277 = vmatprep.subr.bf16.mxu0 %v1147
    %1278 = vmatpush1.bf16.msra.mxu0 %v1146
    %1279 = vmatprep.subr.bf16.mxu0 %v1154
    %1280 = vmatpush1.bf16.msra.mxu0 %v1153
    %1281 = vmatprep.subr.bf16.mxu0 0
    %1282 = vmatpush1.bf16.msra.mxu0 0
    %1283 = vmatprep.subr.bf16.mxu0 0
    %1284 = vmatpush1.bf16.msra.mxu0 0
    %1285 = vmatprep.subr.bf16.mxu0 0
    %1286 = vmatpush1.bf16.msra.mxu0 0
    %1287 = vmatprep.subr.bf16.mxu0 0
    %1288 = vmatpush1.bf16.msra.mxu0 0
    %1289 = vmatprep.subr.bf16.mxu0 0
    %1290 = vmatpush1.bf16.msra.mxu0 0
    %1291 = vmatprep.subr.bf16.mxu0 0
    %1292 = vmatpush1.bf16.msra.mxu0 0
    %1293 = vmatprep.subr.bf16.mxu0 0
    %1294 = vmatpush1.bf16.msra.mxu0 0
    %1295 = vmatprep.subr.bf16.mxu0 0
    %1296 = vmatpush1.bf16.msra.mxu0 0
    %1297 = vmatprep.subr.bf16.mxu0 0
    %1298 = vmatpush1.bf16.msra.mxu0 0
    %1299 = vmatprep.subr.bf16.mxu0 0
    %1300 = vmatpush1.bf16.msra.mxu0 0
    %1301 = vmatprep.subr.bf16.mxu0 0
    %1302 = vmatpush1.bf16.msra.mxu0 0
    %1303 = vmatprep.subr.bf16.mxu0 0
    %1304 = vmatpush1.bf16.msra.mxu0 0
    %1305 = vmatprep.mubr.bf16.mxu0 0
    %1306 = vmatmul.mubr.bf16.gmra.mrb[0].mxu0 %v1185
    %v1307 = vpop.f32.mrb[0].mxu0
    %v1308 = vadd.f32 %v1024, %v1307
    %v1309 = vpop.f32.mrb[0].mxu0
    %v1310 = vadd.f32 %v1028, %v1309
    %v1311 = vpop.f32.mrb[0].mxu0
    %v1312 = vadd.f32 %v1024, %v1311
    %v1313 = vpop.f32.mrb[0].mxu0
    %v1314 = vadd.f32 %v1028, %v1313
    %1315 = vdwg.mxu0
    %1316 = vmatprep.subr.bf16.mxu0 0
    %1317 = vmatpush1.bf16.msra.mxu0 %v1134
    %1318 = vmatprep.subr.bf16.mxu0 0
    %1319 = vmatpush1.bf16.msra.mxu0 %v1141
    %1320 = vmatprep.subr.bf16.mxu0 0
    %1321 = vmatpush1.bf16.msra.mxu0 %v1148
    %1322 = vmatprep.subr.bf16.mxu0 0
    %1323 = vmatpush1.bf16.msra.mxu0 %v1155
    %1324 = vmatprep.subr.bf16.mxu0 0
    %1325 = vmatpush1.bf16.msra.mxu0 0
    %1326 = vmatprep.subr.bf16.mxu0 0
    %1327 = vmatpush1.bf16.msra.mxu0 0
    %1328 = vmatprep.subr.bf16.mxu0 0
    %1329 = vmatpush1.bf16.msra.mxu0 0
    %1330 = vmatprep.subr.bf16.mxu0 0
    %1331 = vmatpush1.bf16.msra.mxu0 0
    %1332 = vmatprep.subr.bf16.mxu0 0
    %1333 = vmatpush1.bf16.msra.mxu0 0
    %1334 = vmatprep.subr.bf16.mxu0 0
    %1335 = vmatpush1.bf16.msra.mxu0 0
    %1336 = vmatprep.subr.bf16.mxu0 0
    %1337 = vmatpush1.bf16.msra.mxu0 0
    %1338 = vmatprep.subr.bf16.mxu0 0
    %1339 = vmatpush1.bf16.msra.mxu0 0
    %1340 = vmatprep.subr.bf16.mxu0 0
    %1341 = vmatpush1.bf16.msra.mxu0 0
    %1342 = vmatprep.subr.bf16.mxu0 0
    %1343 = vmatpush1.bf16.msra.mxu0 0
    %1344 = vmatprep.subr.bf16.mxu0 0
    %1345 = vmatpush1.bf16.msra.mxu0 0
    %1346 = vmatprep.subr.bf16.mxu0 0
    %1347 = vmatpush1.bf16.msra.mxu0 0
    %1348 = vmatprep.mubr.bf16.mxu0 0
    %1349 = vmatmul.mubr.bf16.gmra.mrb[0].mxu0 %v1185
    %v1350 = vpop.f32.mrb[0].mxu0
    %v1351 = vadd.f32 %v1032, %v1350
    %v1352 = vpop.f32.mrb[0].mxu0
    %v1353 = vpop.f32.mrb[0].mxu0
    %v1354 = vadd.f32 %v1032, %v1353
    %v1355 = vpop.f32.mrb[0].mxu0
    %1356 = vdwg.mxu0
    %v1357 = vxor.u32 %v1222, 2147483648
    %v1358 = vxor.u32 %v1224, 2147483648
    %v1359 = vxor.u32 %v1265, 2147483648
    %v1360 = vxor.u32 %v1267, 2147483648
    %v1361 = vxor.u32 %v1308, 2147483648
    %v1362 = vxor.u32 %v1310, 2147483648
    %v1363 = vxor.u32 %v1351, 2147483648
    %v1364 = vxor.u32 %v1226, 2147483648
    %v1365 = vxor.u32 %v1228, 2147483648
    %v1366 = vxor.u32 %v1269, 2147483648
    %v1367 = vxor.u32 %v1271, 2147483648
    %v1368 = vxor.u32 %v1312, 2147483648
    %v1369 = vxor.u32 %v1314, 2147483648
    %v1370 = vxor.u32 %v1354, 2147483648
    %v1371 = vmul.f32 %v1357, 1.442695
    %v1372 = vpow.pop %v1371
    %v1373 = vmul.f32 %v1358, 1.442695
    %v1374 = vpow.pop %v1373
    %v1375 = vmul.f32 %v1359, 1.442695
    %v1376 = vpow.pop %v1375
    %v1377 = vmul.f32 %v1360, 1.442695
    %v1378 = vpow.pop %v1377
    %v1379 = vmul.f32 %v1361, 1.442695
    %v1380 = vpow.pop %v1379
    %v1381 = vmul.f32 %v1362, 1.442695
    %v1382 = vpow.pop %v1381
    %v1383 = vmul.f32 %v1363, 1.442695
    %v1384 = vpow.pop %v1383
    %v1385 = vmul.f32 %v1364, 1.442695
    %v1386 = vpow.pop %v1385
    %v1387 = vmul.f32 %v1365, 1.442695
    %v1388 = vpow.pop %v1387
    %v1389 = vmul.f32 %v1366, 1.442695
    %v1390 = vpow.pop %v1389
    %v1391 = vmul.f32 %v1367, 1.442695
    %v1392 = vpow.pop %v1391
    %v1393 = vmul.f32 %v1368, 1.442695
    %v1394 = vpow.pop %v1393
    %v1395 = vmul.f32 %v1369, 1.442695
    %v1396 = vpow.pop %v1395
    %v1397 = vmul.f32 %v1370, 1.442695
    %v1398 = vpow.pop %v1397
    %v1399 = vadd.f32 %v1372, 1.0
    %v1400 = vadd.f32 %v1374, 1.0
    %v1401 = vadd.f32 %v1376, 1.0
    %v1402 = vadd.f32 %v1378, 1.0
    %v1403 = vadd.f32 %v1380, 1.0
    %v1404 = vadd.f32 %v1382, 1.0
    %v1405 = vadd.f32 %v1384, 1.0
    %v1406 = vadd.f32 %v1386, 1.0
    %v1407 = vadd.f32 %v1388, 1.0
    %v1408 = vadd.f32 %v1390, 1.0
    %v1409 = vadd.f32 %v1392, 1.0
    %v1410 = vadd.f32 %v1394, 1.0
    %v1411 = vadd.f32 %v1396, 1.0
    %v1412 = vadd.f32 %v1398, 1.0
    %v1413 = vrcp.pop %v1399
    %v1414 = vmul.f32 1.0, %v1413
    %v1415 = vrcp.pop %v1400
    %v1416 = vmul.f32 1.0, %v1415
    %v1417 = vrcp.pop %v1401
    %v1418 = vmul.f32 1.0, %v1417
    %v1419 = vrcp.pop %v1402
    %v1420 = vmul.f32 1.0, %v1419
    %v1421 = vrcp.pop %v1403
    %v1422 = vmul.f32 1.0, %v1421
    %v1423 = vrcp.pop %v1404
    %v1424 = vmul.f32 1.0, %v1423
    %v1425 = vrcp.pop %v1405
    %v1426 = vmul.f32 1.0, %v1425
    %v1427 = vrcp.pop %v1406
    %v1428 = vmul.f32 1.0, %v1427
    %v1429 = vrcp.pop %v1407
    %v1430 = vmul.f32 1.0, %v1429
    %v1431 = vrcp.pop %v1408
    %v1432 = vmul.f32 1.0, %v1431
    %v1433 = vrcp.pop %v1409
    %v1434 = vmul.f32 1.0, %v1433
    %v1435 = vrcp.pop %v1410
    %v1436 = vmul.f32 1.0, %v1435
    %v1437 = vrcp.pop %v1411
    %v1438 = vmul.f32 1.0, %v1437
    %v1439 = vrcp.pop %v1412
    %v1440 = vmul.f32 1.0, %v1439
    %v1441 = vpack.c.bf16 %v1428, %v1414
    %v1442 = vpack.c.bf16 %v1430, %v1416
    %v1443 = vpack.c.bf16 %v1432, %v1418
    %v1444 = vpack.c.bf16 %v1434, %v1420
    %v1445 = vpack.c.bf16 %v1436, %v1422
    %v1446 = vpack.c.bf16 %v1438, %v1424
    %v1447 = vpack.c.bf16 %v1440, %v1426
    %v1455 = vunpack.c.l.b16 %v1441
    %v1456 = vunpack.c.l.b16 %v1442
    %v1457 = vunpack.c.l.b16 %v1443
    %v1458 = vunpack.c.l.b16 %v1444
    %v1459 = vunpack.c.l.b16 %v1445
    %v1460 = vunpack.c.l.b16 %v1446
    %v1461 = vunpack.c.l.b16 %v1447
    %v1462 = vunpack.c.h.b16 %v1441
    %v1463 = vunpack.c.h.b16 %v1442
    %v1464 = vunpack.c.h.b16 %v1443
    %v1465 = vunpack.c.h.b16 %v1444
    %v1466 = vunpack.c.h.b16 %v1445
    %v1467 = vunpack.c.h.b16 %v1446
    %v1468 = vunpack.c.h.b16 %v1447
    %v1469 = vpack.c.b16 %v1456, %v1455
    %v1470 = vpack.c.b16 %v1458, %v1457
    %v1471 = vpack.c.b16 %v1460, %v1459
    %v1472 = vpack.c.b16 %v1461, %v1461
    %v1473 = vpack.c.b16 %v1463, %v1462
    %v1474 = vpack.c.b16 %v1465, %v1464
    %v1475 = vpack.c.b16 %v1467, %v1466
    %v1476 = vpack.c.b16 %v1468, %v1468
    %1485 = vst [vmem:[#allocation2] sm:$0xff] %v1469
    %1486 = vst [vmem:[#allocation2 + $0x8] sm:$0xff] %v1470
    %1487 = vst [vmem:[#allocation2 + $0x10] sm:$0xff] %v1471
    %1488 = vst [vmem:[#allocation2 + $0x18] sm:$0xf] %v1472
    %1489 = vst [vmem:[#allocation2 + $0x1c] sm:$0xff] %v1473
    %1490 = vst [vmem:[#allocation2 + $0x24] sm:$0xff] %v1474
    %1491 = vst [vmem:[#allocation2 + $0x2c] sm:$0xff] %v1475
    %1492 = vst [vmem:[#allocation2 + $0x34] sm:$0xf] %v1476
    %1493 = vst [vmem:[#allocation4] sm:$0xff] %v814
    %1494 = vst [vmem:[#allocation4 + $0x8] sm:$0xff] %v817
    // Predicated region
    $region58: #{tpu_custom_call.1} parent=1 // pred_check
      _
    $region59: #{tpu_custom_call.1} parent=1 // pred_check_branch
      %1496 = sbr.rel (0) target = $region61
    $region60: #{tpu_custom_call.1} parent=1 // pred_region
      %s1498 = ssub.s32 896, 896
      %1499 = vsyncadd [#allocation3], %s1498
      %s1500 = sshll.u32 [#allocation2], 4
      %s1501 = int_to_ptr.vmem [resolvable:$true] %s1500
      %1506 = dma.vmem_to_hbm [thread:$0]  %s1501, 896, %s14, [#allocation3], 448, 448, 28
    $region61: #{tpu_custom_call.1} parent=1 // pred_fallthru
      _
    // Predicated region
    $region62: #{tpu_custom_call.1} parent=1 // pred_check
      _
    $region63: #{tpu_custom_call.1} parent=1 // pred_check_branch
      %1508 = sbr.rel (0) target = $region65
    $region64: #{tpu_custom_call.1} parent=1 // pred_region
      %s1510 = ssub.s32 256, 256
      %1511 = vsyncadd [#allocation5], %s1510
      %s1512 = sshll.u32 [#allocation4], 4
      %s1513 = int_to_ptr.vmem [resolvable:$true] %s1512
      %1518 = dma.vmem_to_hbm [thread:$0]  %s1513, 256, %s15, [#allocation5], 128, 128, 8
    $region65: #{tpu_custom_call.1} parent=1 // pred_fallthru
      _
    // Predicated region
    $region66: #{tpu_custom_call.1} parent=1 // pred_check
      _
    $region67: #{tpu_custom_call.1} parent=1 // pred_check_branch
      %1520 = sbr.rel (0) target = $region69
    $region68: #{tpu_custom_call.1} parent=1 // pred_region
      %1521 = dma.done [#allocation3], 896
    $region69: #{tpu_custom_call.1} parent=1 // pred_fallthru
      _
    // Predicated region
    $region70: #{tpu_custom_call.1} parent=1 // pred_check
      _
    $region71: #{tpu_custom_call.1} parent=1 // pred_check_branch
      %1523 = sbr.rel (0) target = $region73
    $region72: #{tpu_custom_call.1} parent=1 // pred_region
      %1524 = dma.done [#allocation5], 256
    $region73: #{tpu_custom_call.1} parent=1 // pred_fallthru
      _
    %1525 = vsyncpa [#allocation3], 1
    %1526 = vsyncpa [#allocation5], 1

</llo_original>
